<compile_context>
chip_gen: v7x
topology: tpu7x:2x2x1
jax: 0.10.0
libtpu: 0.0.40
codegen_flags: <defaults>
</compile_context>

<pallas_src>
import functools

import numpy as np
import jax
import jax.numpy as jnp
from jax.experimental import pallas as pl
from jax.experimental.pallas import tpu as pltpu

# Atom index convention: 0=N, 1=Ca, 2=C, 3=O, 4=Cb(virtual)
# 24 (A, B) pairs in the exact order of the PyTorch RBF_all list
# (the first RBF block uses D_neighbors and is handled separately).
PAIRS = [
    (0, 0), (2, 2), (3, 3), (4, 4),
    (1, 0), (1, 2), (1, 3), (1, 4),
    (0, 2), (0, 3), (0, 4),
    (4, 2), (4, 3), (3, 2),
    (0, 1), (2, 1), (3, 1), (4, 1),
    (2, 0), (3, 0), (4, 0),
    (2, 4), (3, 4), (2, 3),
]

NUM_PAIRS = 24
NUM_RBF = 16
NUM_POS = 16
NUM_CLASSES = 2 * 32 + 1 + 1           # 66
RBF_TOTAL = 25 * NUM_RBF               # 400
EDGE_IN = NUM_POS + RBF_TOTAL          # 416
FEAT_PAD = 512                         # 400 RBF + 66 one-hot + zero padding
M_ROWS = 2 * NUM_PAIRS + 3             # 51
D_MIN, D_MAX = 2.0, 22.0
RBF_SIGMA = (D_MAX - D_MIN) / NUM_RBF  # 1.25
LN_EPS = 1e-5

# Packed per-edge input layout ([R, 32] f32):
#   lanes  0..14 : self atoms (N,Ca,C,O,Cb) x (x,y,z)
#   lane   15    : D_neighbors (masked top-k Ca-Ca distance)
#   lanes 16..30 : neighbor atoms (N,Ca,C,O,Cb) x (x,y,z)
#   lane   31    : positional index d (exact small integer stored in f32)
PACK_W = 32


def _round_up(x, m):
    return ((x + m - 1) // m) * m


def _build_static_tables():
    """Static matrices used inside the kernel (built on host, exact values)."""
    # S_diff [32,72]: packed(32 lanes) -> 24-pair coordinate differences,
    #   diff[:, 24*c + p] = self[3*A_p + c] - nb[3*B_p + c]
    # Entries are +-1/0, exact in bf16 (enables the hi/lo split trick).
    s_diff = np.zeros((PACK_W, 3 * NUM_PAIRS), np.float32)
    for p, (a, b) in enumerate(PAIRS):
        for c in range(3):
            s_diff[3 * a + c, 24 * c + p] += 1.0
            s_diff[16 + 3 * b + c, 24 * c + p] -= 1.0

    # M [51,512]: [D^2(24) | D(24) | d_nb^2 | d_nb | 1] -> -((d - mu_k)/sigma)^2
    # for all 25 RBF blocks.  Padding lanes 400..511 get a huge negative constant
    # so the single exp() makes them exactly 0 before the one-hot is written.
    inv_s2 = 1.0 / (RBF_SIGMA * RBF_SIGMA)
    mu = np.linspace(D_MIN, D_MAX, NUM_RBF).astype(np.float64)
    m = np.zeros((M_ROWS, FEAT_PAD), np.float64)
    for blk in range(25):
        for k in range(NUM_RBF):
            lane = NUM_RBF * blk + k
            if blk == 0:                       # D_neighbors block
                m[48, lane] = -inv_s2          # * d_nb^2
                m[49, lane] = 2.0 * mu[k] * inv_s2   # * d_nb
            else:                              # atom pair blk-1
                m[blk - 1, lane] = -inv_s2                 # * D^2
                m[24 + blk - 1, lane] = 2.0 * mu[k] * inv_s2   # * D
            m[50, lane] = -(mu[k] * mu[k]) * inv_s2        # constant
    m[50, RBF_TOTAL:] = -1e4                   # exp -> 0 on padding / one-hot lanes
    return (jnp.asarray(s_diff, jnp.bfloat16), jnp.asarray(m, jnp.float32))


def _edge_kernel(packed_ref, sdiff_ref, m_ref, w_ref, bias_ref,
                 gamma_ref, beta_ref, out_ref):
    """[T] packed edge rows -> [T, C] normalized edge embeddings."""
    T = packed_ref.shape[0]
    packed = packed_ref[...]                                          # [T,32] f32

    # --- 24 inter-atom squared distances ---------------------------------------
    # hi/lo bf16 split of the coords: S_diff is exact in bf16, so two single-pass
    # bf16 matmuls reproduce the multi-pass f32 selection matmul (review item 2a).
    x_hi = packed.astype(jnp.bfloat16)
    x_lo = (packed - x_hi.astype(jnp.float32)).astype(jnp.bfloat16)
    s_diff = sdiff_ref[...]
    diff = (jnp.dot(x_hi, s_diff, preferred_element_type=jnp.float32) +
            jnp.dot(x_lo, s_diff, preferred_element_type=jnp.float32))  # [T,72]
    diff2 = diff * diff
    # Sum the x/y/z component groups with static lane slices (no S_sum matmul).
    dsq = (diff2[:, 0:NUM_PAIRS]
           + diff2[:, NUM_PAIRS:2 * NUM_PAIRS]
           + diff2[:, 2 * NUM_PAIRS:3 * NUM_PAIRS]) + 1e-6             # == D^2
    d24 = jnp.sqrt(dsq)                                                # == D

    # --- fused RBF argument: ONE f32 matmul gives -z^2 for all 512 lanes -------
    d_nb = packed[:, 15:16]                                            # [T,1]
    ones = jnp.ones((T, 1), jnp.float32)
    v = jnp.concatenate([dsq, d24, d_nb * d_nb, d_nb, ones], axis=-1)  # [T,51]
    neg_z2 = jnp.dot(v, m_ref[...], preferred_element_type=jnp.float32)  # [T,512]
    rbf = jnp.exp(neg_z2)                        # lanes >= 400 -> exp(-1e4) == 0
    # TODO(synk): on v6e/v7x the exp/where path could run in bf16 (2x VPU/EUP rate)
    # but the ~1-2% RBF peak error needs re-validation against the tolerance.

    # --- positional one-hot written straight into the padded 512-lane tile -----
    d_idx = packed[:, 31:32].astype(jnp.int32)                         # [T,1]
    iota = jax.lax.broadcasted_iota(jnp.int32, (T, FEAT_PAD), 1)
    feat = jnp.where(iota == d_idx + RBF_TOTAL, 1.0, rbf).astype(jnp.bfloat16)

    # --- single fused projection (bf16 MXU, f32 accumulation) + LayerNorm ------
    acc = jnp.dot(feat, w_ref[...], preferred_element_type=jnp.float32)  # [T,C]
    acc = acc + bias_ref[...]
    mean = jnp.mean(acc, axis=-1, keepdims=True)
    xc = acc - mean
    var = jnp.mean(xc * xc, axis=-1, keepdims=True)
    out = xc * jax.lax.rsqrt(var + LN_EPS) * gamma_ref[...] + beta_ref[...]
    out_ref[...] = out.astype(out_ref.dtype)


def edge_embed_pallas(packed, w512_bf16, b_fused, gamma, beta, *,
                      tile=2048, vmem_limit_bytes=None, out_dtype=jnp.bfloat16):
    """Runs the fused edge kernel over R = B*L*K packed edge rows.

    Per-generation tuning (review items 4-6):
      * v6e : tile=4096, vmem_limit_bytes ~ 48-64 MiB.
      * v5e : tile=2048, vmem_limit_bytes ~ 32-48 MiB (16 MiB scoped default too small).
      * v7x : tile<=4096 but keep >=2 grid steps per TensorCore (the row grid is
              marked "parallel" so it shards across both TCs); vmem_limit <= 48 MiB
              since physical VMEM is only 64 MiB per TC.
    """
    R = packed.shape[0]
    C = w512_bf16.shape[1]
    s_diff, m_mat = _build_static_tables()

    tile = max(8, min(_round_up(tile, 8), _round_up(R, 8)))
    Rp = _round_up(R, tile)
    if Rp != R:
        packed = jnp.pad(packed, ((0, Rp - R), (0, 0)))

    cp_kwargs = dict(dimension_semantics=("parallel",))
    if vmem_limit_bytes is None and tile >= 1024:
        vmem_limit_bytes = 48 * 1024 * 1024    # big row tiles need > default scoped VMEM
    if vmem_limit_bytes is not None:
        cp_kwargs["vmem_limit_bytes"] = vmem_limit_bytes

    out = pl.pallas_call(
        _edge_kernel,
        out_shape=jax.ShapeDtypeStruct((Rp, C), out_dtype),
        grid_spec=pltpu.PrefetchScalarGridSpec(
            num_scalar_prefetch=0,
            grid=(Rp // tile,),
            in_specs=[
                pl.BlockSpec((tile, PACK_W), lambda i: (i, 0)),            # packed edges
                pl.BlockSpec((PACK_W, 3 * NUM_PAIRS), lambda i: (0, 0)),   # S_diff (bf16)
                pl.BlockSpec((M_ROWS, FEAT_PAD), lambda i: (0, 0)),        # fused -z^2 matrix (f32)
                pl.BlockSpec((FEAT_PAD, C), lambda i: (0, 0)),             # fused projection (bf16)
                pl.BlockSpec((1, C), lambda i: (0, 0)),                    # fused bias (f32)
                pl.BlockSpec((1, C), lambda i: (0, 0)),                    # gamma
                pl.BlockSpec((1, C), lambda i: (0, 0)),                    # beta
            ],
            out_specs=pl.BlockSpec((tile, C), lambda i: (i, 0)),
        ),
        compiler_params=pltpu.CompilerParams(**cp_kwargs),
    )(packed, s_diff, m_mat, w512_bf16, b_fused, gamma, beta)
    # TODO(synk): mark the constant-weight inputs single-buffered
    # (pipeline_mode=pl.Buffered(1)) once that knob is stable in this JAX version.
    return out[:R]


@functools.partial(jax.jit, static_argnames=("top_k", "tile", "out_dtype"))
def protein_features_forward(params, X, mask, R_idx, chain_labels,
                             top_k=48, tile=2048, out_dtype=jnp.bfloat16):
    """Mirrors ProteinFeatures.forward (augment_eps=0). Returns (E, E_idx)."""
    B, L = X.shape[0], X.shape[1]
    X = X.astype(jnp.float32)
    mask = mask.astype(jnp.float32)

    # Virtual Cb + 5-atom view (glue)
    b_vec = X[:, :, 1, :] - X[:, :, 0, :]
    c_vec = X[:, :, 2, :] - X[:, :, 1, :]
    Ca = X[:, :, 1, :]
    Cb = -0.58273431 * jnp.cross(b_vec, c_vec) + 0.56802827 * b_vec - 0.54067466 * c_vec + Ca
    atoms5 = jnp.stack([X[:, :, 0, :], Ca, X[:, :, 2, :], X[:, :, 3, :], Cb], axis=2)
    self15 = atoms5.reshape(B, L, 15)

    # _dist: masked Ca pairwise distances + top-k nearest neighbors (glue)
    mask_2D = mask[:, None, :] * mask[:, :, None]
    dX = Ca[:, None, :, :] - Ca[:, :, None, :]
    D = mask_2D * jnp.sqrt(jnp.sum(dX ** 2, axis=-1) + 1e-6)
    D_adjust = D + (1.0 - mask_2D) * jnp.max(D, axis=-1, keepdims=True)
    K = min(top_k, L)
    neg_vals, E_idx = jax.lax.top_k(-D_adjust, K)            # smallest-K, ascending
    D_neighbors = -neg_vals                                  # [B, L, K]

    # Gather neighbor atom coords + positional indices (glue)
    nb15 = jax.vmap(lambda a, idx: a[idx])(self15, E_idx)    # [B, L, K, 15]
    R_idx = R_idx.astype(jnp.int32)
    chain_labels = chain_labels.astype(jnp.int32)
    offset = jnp.take_along_axis(R_idx[:, :, None] - R_idx[:, None, :], E_idx, axis=2)
    same_chain = jnp.take_along_axis(
        (chain_labels[:, :, None] == chain_labels[:, None, :]).astype(jnp.int32),
        E_idx, axis=2)
    d_idx = jnp.clip(offset + 32, 0, 64) * same_chain + (1 - same_chain) * 65

    # Pack all per-edge inputs into one [R, 32] array (single DMA stream).
    # TODO(synk): residue-level dedup of the self-atom coords (read each residue row
    # once via a residue-keyed BlockSpec and replicate in-kernel) would cut the
    # glue-side broadcast+concat HBM traffic roughly in half.
    self_b = jnp.broadcast_to(self15[:, :, None, :], (B, L, K, 15))
    packed = jnp.concatenate(
        [self_b,
         D_neighbors[..., None],
         nb15,
         d_idx.astype(jnp.float32)[..., None]], axis=-1).reshape(B * L * K, PACK_W)

    # Offline weight fusion: fold PositionalEncodings' Linear into the edge Linear
    # and concatenate everything into one lane-padded [512, C] bf16 projection.
    W_edge = params["W_edge"].astype(jnp.float32)                       # [416, C]
    C_out = W_edge.shape[1]
    W_pos_fused = params["W_pos"].astype(jnp.float32) @ W_edge[:NUM_POS]    # [66, C]
    b_fused = (params["b_pos"].astype(jnp.float32) @ W_edge[:NUM_POS]).reshape(1, -1)
    w512 = jnp.zeros((FEAT_PAD, C_out), jnp.float32)
    w512 = w512.at[:RBF_TOTAL].set(W_edge[NUM_POS:])
    w512 = w512.at[RBF_TOTAL:RBF_TOTAL + NUM_CLASSES].set(W_pos_fused)
    w512_bf16 = w512.astype(jnp.bfloat16)

    E_flat = edge_embed_pallas(
        packed, w512_bf16, b_fused,
        params["gamma"].reshape(1, -1).astype(jnp.float32),
        params["beta"].reshape(1, -1).astype(jnp.float32),
        tile=tile, out_dtype=out_dtype)
    E = E_flat.reshape(B, L, K, -1)
    return E, E_idx


def _reference_forward(params, X, mask, R_idx, chain_labels, top_k=48):
    """Pure-JAX f32 reference mirroring the PyTorch module exactly."""
    B, L = X.shape[0], X.shape[1]
    X = X.astype(jnp.float32)
    mask = mask.astype(jnp.float32)
    b_vec = X[:, :, 1] - X[:, :, 0]
    c_vec = X[:, :, 2] - X[:, :, 1]
    Ca = X[:, :, 1]
    Cb = -0.58273431 * jnp.cross(b_vec, c_vec) + 0.56802827 * b_vec - 0.54067466 * c_vec + Ca
    atoms5 = jnp.stack([X[:, :, 0], Ca, X[:, :, 2], X[:, :, 3], Cb], axis=2)

    mask_2D = mask[:, None, :] * mask[:, :, None]
    dX = Ca[:, None] - Ca[:, :, None]
    D = mask_2D * jnp.sqrt(jnp.sum(dX ** 2, -1) + 1e-6)
    D_adjust = D + (1.0 - mask_2D) * jnp.max(D, -1, keepdims=True)
    K = min(top_k, L)
    neg_vals, E_idx = jax.lax.top_k(-D_adjust, K)
    D_neighbors = -neg_vals

    mu = jnp.linspace(D_MIN, D_MAX, NUM_RBF)

    def rbf(d):
        return jnp.exp(-(((d[..., None] - mu) / RBF_SIGMA) ** 2))

    rbf_all = [rbf(D_neighbors)]
    for (a, b) in PAIRS:
        A = atoms5[:, :, a, :]
        Bc = atoms5[:, :, b, :]
        Dab = jnp.sqrt(jnp.sum((A[:, :, None] - Bc[:, None]) ** 2, -1) + 1e-6)
        Dnb = jnp.take_along_axis(Dab, E_idx, axis=2)
        rbf_all.append(rbf(Dnb))
    rbf_all = jnp.concatenate(rbf_all, axis=-1)                          # [B,L,K,400]

    R_idx = R_idx.astype(jnp.int32)
    chain_labels = chain_labels.astype(jnp.int32)
    offset = jnp.take_along_axis(R_idx[:, :, None] - R_idx[:, None, :], E_idx, axis=2)
    same = jnp.take_along_axis(
        (chain_labels[:, :, None] - chain_labels[:, None, :] == 0).astype(jnp.int32),
        E_idx, axis=2)
    d = jnp.clip(offset + 32, 0, 64) * same + (1 - same) * 65
    onehot = jax.nn.one_hot(d, NUM_CLASSES, dtype=jnp.float32)
    pos = onehot @ params["W_pos"] + params["b_pos"]
    feat = jnp.concatenate([pos, rbf_all], axis=-1)                      # [B,L,K,416]
    pre = feat @ params["W_edge"]
    mean = pre.mean(-1, keepdims=True)
    var = ((pre - mean) ** 2).mean(-1, keepdims=True)
    E = (pre - mean) * jax.lax.rsqrt(var + LN_EPS) * params["gamma"] + params["beta"]
    return E, E_idx


if __name__ == "__main__":
    key = jax.random.PRNGKey(0)
    edge_features = 32
    kp1, kp2, kp3, kc1, kc2 = jax.random.split(key, 5)

    # Deterministic synthetic parameters (torch Linear weights stored transposed).
    params = {
        "W_pos": jax.random.normal(kp1, (NUM_CLASSES, NUM_POS), jnp.float32) * 0.1,
        "b_pos": jax.random.normal(kp2, (NUM_POS,), jnp.float32) * 0.1,
        "W_edge": jax.random.normal(kp3, (EDGE_IN, edge_features), jnp.float32) * 0.05,
        "gamma": jnp.ones((edge_features,), jnp.float32),
        "beta": jnp.zeros((edge_features,), jnp.float32),
    }

    def make_inputs(k, B, L):
        X = jax.random.normal(k, (B, L, 4, 3), jnp.float32) * 3.0
        mask = jnp.ones((B, L), jnp.float32)
        R_idx = jnp.broadcast_to(jnp.arange(L, dtype=jnp.int32), (B, L))
        chain_labels = jnp.concatenate(
            [jnp.zeros((B, L // 2), jnp.int32),
             jnp.ones((B, L - L // 2), jnp.int32)], axis=1)
        return X, mask, R_idx, chain_labels

    # Case 1: R = 2*8*8  = 128 edge rows -> single grid step, no padding.
    # Case 2: R = 2*13*13 = 338 edge rows with tile=128 -> 3 grid steps + padded tail.
    cases = [(kc1, 2, 8, 2048), (kc2, 2, 13, 128)]
    for ck, B, L, tile in cases:
        X, mask, R_idx, chain_labels = make_inputs(ck, B, L)
        E, E_idx = protein_features_forward(params, X, mask, R_idx, chain_labels,
                                            top_k=48, tile=tile)
        jax.block_until_ready((E, E_idx))

        # Cross-check against the pure-f32 reference.  The kernel uses bf16 MXU
        # features/weights (f32 accumulation) and a bf16 output per the perf
        # review, so compare LayerNorm outputs at ~3e-2 tolerance.
        E_ref, E_idx_ref = _reference_forward(params, X, mask, R_idx, chain_labels,
                                              top_k=48)
        assert jnp.array_equal(E_idx, E_idx_ref), f"neighbor index mismatch (L={L})"
        assert jnp.allclose(E.astype(jnp.float32), E_ref, atol=3e-2, rtol=3e-2), \
            f"kernel/reference mismatch (L={L})"

    print("KERNEL_OK")
</pallas_src>

<mosaic_0001>
module attributes {stable_mosaic.version = 11 : i64} {
  func.func @_edge_kernel(%arg0: i32, %arg1: memref<128x32xf32, #tpu.memory_space<vmem>>, %arg2: memref<32x72xbf16, #tpu.memory_space<vmem>>, %arg3: memref<51x512xf32, #tpu.memory_space<vmem>>, %arg4: memref<512x32xbf16, #tpu.memory_space<vmem>>, %arg5: memref<1x32xf32, #tpu.memory_space<vmem>>, %arg6: memref<1x32xf32, #tpu.memory_space<vmem>>, %arg7: memref<1x32xf32, #tpu.memory_space<vmem>>, %arg8: memref<128x32xbf16, #tpu.memory_space<vmem>>) attributes {dimension_semantics = [#tpu.dimension_semantics<parallel>], iteration_bounds = array<i64: 1>, scalar_prefetch = 0 : i64, scratch_operands = 0 : i64, tpu.core_type = #tpu.core_type<tc>, window_params = [{transform_indices = @transform_0, window_bounds = array<i64: 128, 32>}, {pipeline_mode = #tpu.pipeline_mode<synchronous>, transform_indices = @transform_1, window_bounds = array<i64: 32, 72>}, {pipeline_mode = #tpu.pipeline_mode<synchronous>, transform_indices = @transform_2, window_bounds = array<i64: 51, 512>}, {pipeline_mode = #tpu.pipeline_mode<synchronous>, transform_indices = @transform_3, window_bounds = array<i64: 512, 32>}, {pipeline_mode = #tpu.pipeline_mode<synchronous>, transform_indices = @transform_4, window_bounds = array<i64: 1, 32>}, {pipeline_mode = #tpu.pipeline_mode<synchronous>, transform_indices = @transform_5, window_bounds = array<i64: 1, 32>}, {pipeline_mode = #tpu.pipeline_mode<synchronous>, transform_indices = @transform_6, window_bounds = array<i64: 1, 32>}, {transform_indices = @transform_7, window_bounds = array<i64: 128, 32>}]} {
    %c0 = arith.constant 0 : index
    %c0_0 = arith.constant 0 : index
    %0 = vector.load %arg1[%c0, %c0_0] : memref<128x32xf32, #tpu.memory_space<vmem>>, vector<128x32xf32>
    %1 = arith.truncf %0 : vector<128x32xf32> to vector<128x32xbf16>
    %2 = arith.extf %1 : vector<128x32xbf16> to vector<128x32xf32>
    %3 = arith.subf %0, %2 : vector<128x32xf32>
    %4 = arith.truncf %3 : vector<128x32xf32> to vector<128x32xbf16>
    %c0_1 = arith.constant 0 : index
    %c0_2 = arith.constant 0 : index
    %5 = vector.load %arg2[%c0_1, %c0_2] : memref<32x72xbf16, #tpu.memory_space<vmem>>, vector<32x72xbf16>
    %cst = arith.constant dense<0.000000e+00> : vector<128x72xf32>
    %6 = tpu.matmul %1, %5, %cst {dimension_numbers = #tpu.dot_dimension_numbers<[1], [0], [0], [1], [0, 0, 1, 1], [], []>} : vector<128x32xbf16>, vector<32x72xbf16>, vector<128x72xf32> -> vector<128x72xf32>
    %cst_3 = arith.constant dense<0.000000e+00> : vector<128x72xf32>
    %7 = tpu.matmul %4, %5, %cst_3 {dimension_numbers = #tpu.dot_dimension_numbers<[1], [0], [0], [1], [0, 0, 1, 1], [], []>} : vector<128x32xbf16>, vector<32x72xbf16>, vector<128x72xf32> -> vector<128x72xf32>
    %8 = arith.addf %6, %7 : vector<128x72xf32>
    %9 = arith.mulf %8, %8 : vector<128x72xf32>
    %10 = vector.extract_strided_slice %9 {offsets = [0, 0], sizes = [128, 24], strides = [1, 1]} : vector<128x72xf32> to vector<128x24xf32>
    %11 = vector.extract_strided_slice %9 {offsets = [0, 24], sizes = [128, 24], strides = [1, 1]} : vector<128x72xf32> to vector<128x24xf32>
    %12 = arith.addf %10, %11 : vector<128x24xf32>
    %13 = vector.extract_strided_slice %9 {offsets = [0, 48], sizes = [128, 24], strides = [1, 1]} : vector<128x72xf32> to vector<128x24xf32>
    %14 = arith.addf %12, %13 : vector<128x24xf32>
    %cst_4 = arith.constant 9.99999997E-7 : f32
    %15 = vector.broadcast %cst_4 : f32 to vector<128x24xf32>
    %16 = arith.addf %14, %15 : vector<128x24xf32>
    %17 = math.sqrt %16 : vector<128x24xf32>
    %18 = vector.extract_strided_slice %0 {offsets = [0, 15], sizes = [128, 1], strides = [1, 1]} : vector<128x32xf32> to vector<128x1xf32>
    %cst_5 = arith.constant 1.000000e+00 : f32
    %19 = vector.broadcast %cst_5 : f32 to vector<128x1xf32>
    %20 = arith.mulf %18, %18 : vector<128x1xf32>
    %21 = tpu.concatenate %16, %17, %20, %18, %19 in 1 : vector<128x24xf32>, vector<128x24xf32>, vector<128x1xf32>, vector<128x1xf32>, vector<128x1xf32> -> vector<128x51xf32>
    %c0_6 = arith.constant 0 : index
    %c0_7 = arith.constant 0 : index
    %22 = vector.load %arg3[%c0_6, %c0_7] : memref<51x512xf32, #tpu.memory_space<vmem>>, vector<51x512xf32>
    %cst_8 = arith.constant dense<0.000000e+00> : vector<128x512xf32>
    %23 = tpu.matmul %21, %22, %cst_8 {dimension_numbers = #tpu.dot_dimension_numbers<[1], [0], [0], [1], [0, 0, 1, 1], [], []>} : vector<128x51xf32>, vector<51x512xf32>, vector<128x512xf32> -> vector<128x512xf32>
    %24 = math.exp %23 : vector<128x512xf32>
    %25 = vector.extract_strided_slice %0 {offsets = [0, 31], sizes = [128, 1], strides = [1, 1]} : vector<128x32xf32> to vector<128x1xf32>
    %26 = arith.fptosi %25 : vector<128x1xf32> to vector<128x1xi32>
    %27 = tpu.iota {dimensions = array<i32: 1>} : vector<128x512xi32>
    %c400_i32 = arith.constant 400 : i32
    %28 = vector.broadcast %c400_i32 : i32 to vector<128x1xi32>
    %29 = arith.addi %26, %28 : vector<128x1xi32>
    %30 = vector.broadcast %29 : vector<128x1xi32> to vector<128x512xi32>
    %31 = arith.cmpi eq, %27, %30 : vector<128x512xi32>
    %cst_9 = arith.constant 1.000000e+00 : f32
    %32 = vector.broadcast %cst_9 : f32 to vector<128x512xf32>
    %33 = arith.select %31, %32, %24 : vector<128x512xi1>, vector<128x512xf32>
    %34 = arith.truncf %33 : vector<128x512xf32> to vector<128x512xbf16>
    %c0_10 = arith.constant 0 : index
    %c0_11 = arith.constant 0 : index
    %35 = vector.load %arg4[%c0_10, %c0_11] : memref<512x32xbf16, #tpu.memory_space<vmem>>, vector<512x32xbf16>
    %cst_12 = arith.constant dense<0.000000e+00> : vector<128x32xf32>
    %36 = tpu.matmul %34, %35, %cst_12 {dimension_numbers = #tpu.dot_dimension_numbers<[1], [0], [0], [1], [0, 0, 1, 1], [], []>} : vector<128x512xbf16>, vector<512x32xbf16>, vector<128x32xf32> -> vector<128x32xf32>
    %c0_13 = arith.constant 0 : index
    %c0_14 = arith.constant 0 : index
    %37 = vector.load %arg5[%c0_13, %c0_14] : memref<1x32xf32, #tpu.memory_space<vmem>>, vector<1x32xf32>
    %38 = vector.broadcast %37 : vector<1x32xf32> to vector<128x32xf32>
    %39 = arith.addf %36, %38 : vector<128x32xf32>
    %cst_15 = arith.constant dense<0.000000e+00> : vector<128xf32>
    %40 = vector.multi_reduction <add>, %39, %cst_15 [1] : vector<128x32xf32> to vector<128xf32>
    %41 = vector.shape_cast %40 : vector<128xf32> to vector<128x1xf32>
    %cst_16 = arith.constant 3.200000e+01 : f32
    %42 = vector.broadcast %cst_16 : f32 to vector<128x1xf32>
    %43 = arith.divf %41, %42 : vector<128x1xf32>
    %44 = vector.broadcast %43 : vector<128x1xf32> to vector<128x32xf32>
    %45 = arith.subf %39, %44 : vector<128x32xf32>
    %46 = arith.mulf %45, %45 : vector<128x32xf32>
    %cst_17 = arith.constant dense<0.000000e+00> : vector<128xf32>
    %47 = vector.multi_reduction <add>, %46, %cst_17 [1] : vector<128x32xf32> to vector<128xf32>
    %48 = vector.shape_cast %47 : vector<128xf32> to vector<128x1xf32>
    %cst_18 = arith.constant 3.200000e+01 : f32
    %49 = vector.broadcast %cst_18 : f32 to vector<128x1xf32>
    %50 = arith.divf %48, %49 : vector<128x1xf32>
    %cst_19 = arith.constant 9.99999974E-6 : f32
    %51 = vector.broadcast %cst_19 : f32 to vector<128x1xf32>
    %52 = arith.addf %50, %51 : vector<128x1xf32>
    %53 = math.rsqrt %52 : vector<128x1xf32>
    %54 = vector.broadcast %53 : vector<128x1xf32> to vector<128x32xf32>
    %55 = arith.mulf %45, %54 : vector<128x32xf32>
    %c0_20 = arith.constant 0 : index
    %c0_21 = arith.constant 0 : index
    %56 = vector.load %arg6[%c0_20, %c0_21] : memref<1x32xf32, #tpu.memory_space<vmem>>, vector<1x32xf32>
    %57 = vector.broadcast %56 : vector<1x32xf32> to vector<128x32xf32>
    %58 = arith.mulf %55, %57 : vector<128x32xf32>
    %c0_22 = arith.constant 0 : index
    %c0_23 = arith.constant 0 : index
    %59 = vector.load %arg7[%c0_22, %c0_23] : memref<1x32xf32, #tpu.memory_space<vmem>>, vector<1x32xf32>
    %60 = vector.broadcast %59 : vector<1x32xf32> to vector<128x32xf32>
    %61 = arith.addf %58, %60 : vector<128x32xf32>
    %62 = arith.truncf %61 : vector<128x32xf32> to vector<128x32xbf16>
    %c0_24 = arith.constant 0 : index
    %c0_25 = arith.constant 0 : index
    %63 = vector.load %arg8[%c0_24, %c0_25] : memref<128x32xbf16, #tpu.memory_space<vmem>>, vector<128x32xbf16>
    tpu.vector_store %arg8[%c0_24, %c0_25], %62 {strides = array<i32>} : memref<128x32xbf16, #tpu.memory_space<vmem>>, vector<128x32xbf16>,
    return
  }
  func.func @transform_0(%arg0: i32) -> (i32, i32) {
    %c0_i32 = arith.constant 0 : i32
    %c0_i32_0 = arith.constant 0 : i32
    return %arg0, %c0_i32 : i32, i32
  }
  func.func @transform_1(%arg0: i32) -> (i32, i32) {
    %c0_i32 = arith.constant 0 : i32
    %c0_i32_0 = arith.constant 0 : i32
    %c0_i32_1 = arith.constant 0 : i32
    return %c0_i32, %c0_i32_0 : i32, i32
  }
  func.func @transform_2(%arg0: i32) -> (i32, i32) {
    %c0_i32 = arith.constant 0 : i32
    %c0_i32_0 = arith.constant 0 : i32
    %c0_i32_1 = arith.constant 0 : i32
    return %c0_i32, %c0_i32_0 : i32, i32
  }
  func.func @transform_3(%arg0: i32) -> (i32, i32) {
    %c0_i32 = arith.constant 0 : i32
    %c0_i32_0 = arith.constant 0 : i32
    %c0_i32_1 = arith.constant 0 : i32
    return %c0_i32, %c0_i32_0 : i32, i32
  }
  func.func @transform_4(%arg0: i32) -> (i32, i32) {
    %c0_i32 = arith.constant 0 : i32
    %c0_i32_0 = arith.constant 0 : i32
    %c0_i32_1 = arith.constant 0 : i32
    return %c0_i32, %c0_i32_0 : i32, i32
  }
  func.func @transform_5(%arg0: i32) -> (i32, i32) {
    %c0_i32 = arith.constant 0 : i32
    %c0_i32_0 = arith.constant 0 : i32
    %c0_i32_1 = arith.constant 0 : i32
    return %c0_i32, %c0_i32_0 : i32, i32
  }
  func.func @transform_6(%arg0: i32) -> (i32, i32) {
    %c0_i32 = arith.constant 0 : i32
    %c0_i32_0 = arith.constant 0 : i32
    %c0_i32_1 = arith.constant 0 : i32
    return %c0_i32, %c0_i32_0 : i32, i32
  }
  func.func @transform_7(%arg0: i32) -> (i32, i32) {
    %c0_i32 = arith.constant 0 : i32
    %c0_i32_0 = arith.constant 0 : i32
    return %arg0, %c0_i32 : i32, i32
  }
}

</mosaic_0001>

<llo_original>
// kernel: neg.3
$region0: #{neg.3}
  #allocation0 [shape = 's32[1]{0}', space=sflag, size = 0x4, scoped, tag = 'scoped memory for neg.3']
  %s0 = inlined_call_operand.vmem [shape: f32[2,8,8], index: 0, kind: input, shape index: {}]
  %s1 = inlined_call_operand.vmem [shape: f32[2,8,8], index: 1, kind: output, shape index: {}]
  %v2 = vld [vmem:[%s0] sm:$0xff]
  %3 = xla_tuple %v2
  %4 = xla_tuple %3
  %v5 = vxor.u32 %v2, 2147483648
  %6 = xla_tuple %v5
  %7 = vst [vmem:[%s1] sm:$0xff] %v5
  %s8 = scalar_lea.vmem %s0, 8
  %v9 = vld [vmem:[%s8] sm:$0xff]
  %10 = xla_tuple %v9
  %11 = xla_tuple %10
  %v12 = vxor.u32 %v9, 2147483648
  %13 = xla_tuple %v12
  %s14 = scalar_lea.vmem %s1, 8
  %15 = vst [vmem:[%s14] sm:$0xff] %v12

// kernel: protein_features_forward.1
$region0: #{protein_features_forward.1}
  #allocation0 [shape = 'u32[]', space=smem, size = 0x4, offset = 0x4, fixed_abs, tag = 'smem constant byte address 0x4 - core index']
  #allocation1 [shape = 'u32[144,128]{1,0:T(1,128)}', space=vmem, size = 0x12000, scoped, tag = 'internal scratch']
  %s0 = inlined_call_operand.vmem [shape: f32[128,32], index: 0, kind: input, shape index: {}]
  %s1 = inlined_call_operand.vmem [shape: bf16[32,72], index: 1, kind: input, shape index: {}]
  %s2 = inlined_call_operand.vmem [shape: f32[51,512], index: 2, kind: input, shape index: {}]
  %s3 = inlined_call_operand.vmem [shape: bf16[512,32], index: 3, kind: input, shape index: {}]
  %s4 = inlined_call_operand.vmem [shape: f32[1,32], index: 4, kind: input, shape index: {}]
  %s5 = inlined_call_operand.vmem [shape: f32[1,32], index: 5, kind: input, shape index: {}]
  %s6 = inlined_call_operand.vmem [shape: f32[1,32], index: 6, kind: input, shape index: {}]
  %s7 = inlined_call_operand.hbm [shape: bf16[128,32], index: 7, kind: output, shape index: {}]
  %s8 = sld [smem:[#allocation0]]
  $region38: #{protein_features_forward.1} parent=0
    _
  %s10 = ssub.s32 1, %s8
  %s11 = scalar_select 0, %s10, %s8
  $region1: #{protein_features_forward.1} parent=0
    #allocation2 [shape = 'u8[32768]{0}', space=vmem, size = 0x8000, scoped, tag = 'output window, operand 0, single buffered']
    #allocation3 [shape = 's32[1]{0}', space=sflag, size = 0x4, scoped, tag = 'scoped memory for protein_features_forward.1']
    %12 = vsyncpa [#allocation3], 0
    // Predicated region
    $region2: #{protein_features_forward.1} parent=1 // pred_check
      _
    $region3: #{protein_features_forward.1} parent=1 // pred_check_branch
      %14 = sbr.rel (0) target = $region5
    $region4: #{protein_features_forward.1} parent=1 // pred_region
      _
    $region5: #{protein_features_forward.1} parent=1 // pred_fallthru
      _
    // Predicated region
    $region6: #{protein_features_forward.1} parent=1 // pred_check
      _
    $region7: #{protein_features_forward.1} parent=1 // pred_check_branch
      %16 = sbr.rel (0) target = $region9
    $region8: #{protein_features_forward.1} parent=1 // pred_region
      _
    $region9: #{protein_features_forward.1} parent=1 // pred_fallthru
      _
    // Predicated region
    $region10: #{protein_features_forward.1} parent=1 // pred_check
      _
    $region11: #{protein_features_forward.1} parent=1 // pred_check_branch
      %18 = sbr.rel (0) target = $region13
    $region12: #{protein_features_forward.1} parent=1 // pred_region
      _
    $region13: #{protein_features_forward.1} parent=1 // pred_fallthru
      _
    // Predicated region
    $region14: #{protein_features_forward.1} parent=1 // pred_check
      _
    $region15: #{protein_features_forward.1} parent=1 // pred_check_branch
      %20 = sbr.rel (0) target = $region17
    $region16: #{protein_features_forward.1} parent=1 // pred_region
      _
    $region17: #{protein_features_forward.1} parent=1 // pred_fallthru
      _
    // Predicated region
    $region18: #{protein_features_forward.1} parent=1 // pred_check
      _
    $region19: #{protein_features_forward.1} parent=1 // pred_check_branch
      %22 = sbr.rel (0) target = $region21
    $region20: #{protein_features_forward.1} parent=1 // pred_region
      _
    $region21: #{protein_features_forward.1} parent=1 // pred_fallthru
      _
    // Predicated region
    $region22: #{protein_features_forward.1} parent=1 // pred_check
      _
    $region23: #{protein_features_forward.1} parent=1 // pred_check_branch
      %24 = sbr.rel (0) target = $region25
    $region24: #{protein_features_forward.1} parent=1 // pred_region
      _
    $region25: #{protein_features_forward.1} parent=1 // pred_fallthru
      _
    // Predicated region
    $region26: #{protein_features_forward.1} parent=1 // pred_check
      _
    $region27: #{protein_features_forward.1} parent=1 // pred_check_branch
      %26 = sbr.rel (0) target = $region29
    $region28: #{protein_features_forward.1} parent=1 // pred_region
      _
    $region29: #{protein_features_forward.1} parent=1 // pred_fallthru
      _
    %v28 = vld [vmem:[%s0] sm:$0xff]
    %v29 = vld [vmem:[%s0 + $0x8] sm:$0xff]
    %v30 = vld [vmem:[%s0 + $0x10] sm:$0xff]
    %v31 = vld [vmem:[%s0 + $0x18] sm:$0xff]
    %v32 = vld [vmem:[%s0 + $0x20] sm:$0xff]
    %v33 = vld [vmem:[%s0 + $0x28] sm:$0xff]
    %v34 = vld [vmem:[%s0 + $0x30] sm:$0xff]
    %v35 = vld [vmem:[%s0 + $0x38] sm:$0xff]
    %v36 = vld [vmem:[%s0 + $0x40] sm:$0xff]
    %v37 = vld [vmem:[%s0 + $0x48] sm:$0xff]
    %v38 = vld [vmem:[%s0 + $0x50] sm:$0xff]
    %v39 = vld [vmem:[%s0 + $0x58] sm:$0xff]
    %v40 = vld [vmem:[%s0 + $0x60] sm:$0xff]
    %v41 = vld [vmem:[%s0 + $0x68] sm:$0xff]
    %v42 = vld [vmem:[%s0 + $0x70] sm:$0xff]
    %v43 = vld [vmem:[%s0 + $0x78] sm:$0xff]
    %v44 = vpack.c.bf16 %v29, %v28
    %v45 = vpack.c.bf16 %v31, %v30
    %v46 = vpack.c.bf16 %v33, %v32
    %v47 = vpack.c.bf16 %v35, %v34
    %v48 = vpack.c.bf16 %v37, %v36
    %v49 = vpack.c.bf16 %v39, %v38
    %v50 = vpack.c.bf16 %v41, %v40
    %v51 = vpack.c.bf16 %v43, %v42
    %v52 = vunpack.c.l.bf16 %v44
    %v53 = vunpack.c.h.bf16 %v44
    %v54 = vunpack.c.l.bf16 %v45
    %v55 = vunpack.c.h.bf16 %v45
    %v56 = vunpack.c.l.bf16 %v46
    %v57 = vunpack.c.h.bf16 %v46
    %v58 = vunpack.c.l.bf16 %v47
    %v59 = vunpack.c.h.bf16 %v47
    %v60 = vunpack.c.l.bf16 %v48
    %v61 = vunpack.c.h.bf16 %v48
    %v62 = vunpack.c.l.bf16 %v49
    %v63 = vunpack.c.h.bf16 %v49
    %v64 = vunpack.c.l.bf16 %v50
    %v65 = vunpack.c.h.bf16 %v50
    %v66 = vunpack.c.l.bf16 %v51
    %v67 = vunpack.c.h.bf16 %v51
    %v68 = vsub.f32 %v28, %v52
    %v69 = vsub.f32 %v29, %v53
    %v70 = vsub.f32 %v30, %v54
    %v71 = vsub.f32 %v31, %v55
    %v72 = vsub.f32 %v32, %v56
    %v73 = vsub.f32 %v33, %v57
    %v74 = vsub.f32 %v34, %v58
    %v75 = vsub.f32 %v35, %v59
    %v76 = vsub.f32 %v36, %v60
    %v77 = vsub.f32 %v37, %v61
    %v78 = vsub.f32 %v38, %v62
    %v79 = vsub.f32 %v39, %v63
    %v80 = vsub.f32 %v40, %v64
    %v81 = vsub.f32 %v41, %v65
    %v82 = vsub.f32 %v42, %v66
    %v83 = vsub.f32 %v43, %v67
    %v84 = vpack.c.bf16 %v69, %v68
    %v85 = vpack.c.bf16 %v71, %v70
    %v86 = vpack.c.bf16 %v73, %v72
    %v87 = vpack.c.bf16 %v75, %v74
    %v88 = vpack.c.bf16 %v77, %v76
    %v89 = vpack.c.bf16 %v79, %v78
    %v90 = vpack.c.bf16 %v81, %v80
    %v91 = vpack.c.bf16 %v83, %v82
    %v92 = vld [vmem:[%s1] sm:$0xf]
    %v93 = vld [vmem:[%s1 + $0x4] sm:$0xf]
    %v94 = vld [vmem:[%s1 + $0x8] sm:$0xf]
    %v95 = vld [vmem:[%s1 + $0xc] sm:$0xf]
    %v100 = vunpack.c.l.b16 %v92
    %v101 = vunpack.c.l.b16 %v93
    %v102 = vunpack.c.l.b16 %v94
    %v103 = vunpack.c.l.b16 %v95
    %v104 = vpack.c.b16 %v101, %v100
    %v105 = vpack.c.b16 %v103, %v102
    %vm108 = vcmask 261120
    %v110 = vsel %vm108, %v84, 0
    %v113 = vsel %vm108, %v85, 0
    %v116 = vsel %vm108, %v86, 0
    %v119 = vsel %vm108, %v87, 0
    %v122 = vsel %vm108, %v88, 0
    %v125 = vsel %vm108, %v89, 0
    %v128 = vsel %vm108, %v90, 0
    %v131 = vsel %vm108, %v91, 0
    %133 = vmatprep.subr.bf16.mxu0 0
    %134 = vmatpush1.bf16.msra.mxu0 %v104
    %135 = vmatprep.subr.bf16.mxu0 0
    %136 = vmatpush1.bf16.msra.mxu0 %v105
    %137 = vmatprep.subr.bf16.mxu0 0
    %138 = vmatpush1.bf16.msra.mxu0 0
    %139 = vmatprep.subr.bf16.mxu0 0
    %140 = vmatpush1.bf16.msra.mxu0 0
    %141 = vmatprep.subr.bf16.mxu0 0
    %142 = vmatpush1.bf16.msra.mxu0 0
    %143 = vmatprep.subr.bf16.mxu0 0
    %144 = vmatpush1.bf16.msra.mxu0 0
    %145 = vmatprep.subr.bf16.mxu0 0
    %146 = vmatpush1.bf16.msra.mxu0 0
    %147 = vmatprep.subr.bf16.mxu0 0
    %148 = vmatpush1.bf16.msra.mxu0 0
    %149 = vmatprep.subr.bf16.mxu0 0
    %150 = vmatpush1.bf16.msra.mxu0 0
    %151 = vmatprep.subr.bf16.mxu0 0
    %152 = vmatpush1.bf16.msra.mxu0 0
    %153 = vmatprep.subr.bf16.mxu0 0
    %154 = vmatpush1.bf16.msra.mxu0 0
    %155 = vmatprep.subr.bf16.mxu0 0
    %156 = vmatpush1.bf16.msra.mxu0 0
    %157 = vmatprep.subr.bf16.mxu0 0
    %158 = vmatpush1.bf16.msra.mxu0 0
    %159 = vmatprep.subr.bf16.mxu0 0
    %160 = vmatpush1.bf16.msra.mxu0 0
    %161 = vmatprep.subr.bf16.mxu0 0
    %162 = vmatpush1.bf16.msra.mxu0 0
    %163 = vmatprep.subr.bf16.mxu0 0
    %164 = vmatpush1.bf16.msra.mxu0 0
    %165 = vmatprep.mubr.bf16.mxu0 0
    %166 = vmatmul.mubr.bf16.gmra.mrb[0].mxu0 %v110
    %v167 = vpop.f32.mrb[0].mxu0
    %v168 = vadd.f32 0.0, %v167
    %v169 = vpop.f32.mrb[0].mxu0
    %v170 = vpop.f32.mrb[0].mxu0
    %v171 = vadd.f32 0.0, %v170
    %v172 = vpop.f32.mrb[0].mxu0
    %173 = vmatprep.mubr.bf16.mxu0 0
    %174 = vmatmul.mubr.bf16.gmra.mrb[0].mxu0 %v113
    %v175 = vpop.f32.mrb[0].mxu0
    %v176 = vadd.f32 0.0, %v175
    %v177 = vpop.f32.mrb[0].mxu0
    %v178 = vpop.f32.mrb[0].mxu0
    %v179 = vadd.f32 0.0, %v178
    %v180 = vpop.f32.mrb[0].mxu0
    %181 = vmatprep.mubr.bf16.mxu0 0
    %182 = vmatmul.mubr.bf16.gmra.mrb[0].mxu0 %v116
    %v183 = vpop.f32.mrb[0].mxu0
    %v184 = vadd.f32 0.0, %v183
    %v185 = vpop.f32.mrb[0].mxu0
    %v186 = vpop.f32.mrb[0].mxu0
    %v187 = vadd.f32 0.0, %v186
    %v188 = vpop.f32.mrb[0].mxu0
    %189 = vmatprep.mubr.bf16.mxu0 0
    %190 = vmatmul.mubr.bf16.gmra.mrb[0].mxu0 %v119
    %v191 = vpop.f32.mrb[0].mxu0
    %v192 = vadd.f32 0.0, %v191
    %v193 = vpop.f32.mrb[0].mxu0
    %v194 = vpop.f32.mrb[0].mxu0
    %v195 = vadd.f32 0.0, %v194
    %v196 = vpop.f32.mrb[0].mxu0
    %197 = vmatprep.mubr.bf16.mxu0 0
    %198 = vmatmul.mubr.bf16.gmra.mrb[0].mxu0 %v122
    %v199 = vpop.f32.mrb[0].mxu0
    %v200 = vadd.f32 0.0, %v199
    %v201 = vpop.f32.mrb[0].mxu0
    %v202 = vpop.f32.mrb[0].mxu0
    %v203 = vadd.f32 0.0, %v202
    %v204 = vpop.f32.mrb[0].mxu0
    %205 = vmatprep.mubr.bf16.mxu0 0
    %206 = vmatmul.mubr.bf16.gmra.mrb[0].mxu0 %v125
    %v207 = vpop.f32.mrb[0].mxu0
    %v208 = vadd.f32 0.0, %v207
    %v209 = vpop.f32.mrb[0].mxu0
    %v210 = vpop.f32.mrb[0].mxu0
    %v211 = vadd.f32 0.0, %v210
    %v212 = vpop.f32.mrb[0].mxu0
    %213 = vmatprep.mubr.bf16.mxu0 0
    %214 = vmatmul.mubr.bf16.gmra.mrb[0].mxu0 %v128
    %v215 = vpop.f32.mrb[0].mxu0
    %v216 = vadd.f32 0.0, %v215
    %v217 = vpop.f32.mrb[0].mxu0
    %v218 = vpop.f32.mrb[0].mxu0
    %v219 = vadd.f32 0.0, %v218
    %v220 = vpop.f32.mrb[0].mxu0
    %221 = vmatprep.mubr.bf16.mxu0 0
    %222 = vmatmul.mubr.bf16.gmra.mrb[0].mxu0 %v131
    %v223 = vpop.f32.mrb[0].mxu0
    %v224 = vadd.f32 0.0, %v223
    %v225 = vpop.f32.mrb[0].mxu0
    %v226 = vpop.f32.mrb[0].mxu0
    %v227 = vadd.f32 0.0, %v226
    %v228 = vpop.f32.mrb[0].mxu0
    %229 = vdwg.mxu0
    %v231 = vsel %vm108, %v44, 0
    %v234 = vsel %vm108, %v45, 0
    %v237 = vsel %vm108, %v46, 0
    %v240 = vsel %vm108, %v47, 0
    %v243 = vsel %vm108, %v48, 0
    %v246 = vsel %vm108, %v49, 0
    %v249 = vsel %vm108, %v50, 0
    %v252 = vsel %vm108, %v51, 0
    %254 = vmatprep.subr.bf16.mxu0 0
    %255 = vmatpush1.bf16.msra.mxu0 %v104
    %256 = vmatprep.subr.bf16.mxu0 0
    %257 = vmatpush1.bf16.msra.mxu0 %v105
    %258 = vmatprep.subr.bf16.mxu0 0
    %259 = vmatpush1.bf16.msra.mxu0 0
    %260 = vmatprep.subr.bf16.mxu0 0
    %261 = vmatpush1.bf16.msra.mxu0 0
    %262 = vmatprep.subr.bf16.mxu0 0
    %263 = vmatpush1.bf16.msra.mxu0 0
    %264 = vmatprep.subr.bf16.mxu0 0
    %265 = vmatpush1.bf16.msra.mxu0 0
    %266 = vmatprep.subr.bf16.mxu0 0
    %267 = vmatpush1.bf16.msra.mxu0 0
    %268 = vmatprep.subr.bf16.mxu0 0
    %269 = vmatpush1.bf16.msra.mxu0 0
    %270 = vmatprep.subr.bf16.mxu0 0
    %271 = vmatpush1.bf16.msra.mxu0 0
    %272 = vmatprep.subr.bf16.mxu0 0
    %273 = vmatpush1.bf16.msra.mxu0 0
    %274 = vmatprep.subr.bf16.mxu0 0
    %275 = vmatpush1.bf16.msra.mxu0 0
    %276 = vmatprep.subr.bf16.mxu0 0
    %277 = vmatpush1.bf16.msra.mxu0 0
    %278 = vmatprep.subr.bf16.mxu0 0
    %279 = vmatpush1.bf16.msra.mxu0 0
    %280 = vmatprep.subr.bf16.mxu0 0
    %281 = vmatpush1.bf16.msra.mxu0 0
    %282 = vmatprep.subr.bf16.mxu0 0
    %283 = vmatpush1.bf16.msra.mxu0 0
    %284 = vmatprep.subr.bf16.mxu0 0
    %285 = vmatpush1.bf16.msra.mxu0 0
    %286 = vmatprep.mubr.bf16.mxu0 0
    %287 = vmatmul.mubr.bf16.gmra.mrb[0].mxu0 %v231
    %v288 = vpop.f32.mrb[0].mxu0
    %v289 = vadd.f32 %v168, %v288
    %v290 = vpop.f32.mrb[0].mxu0
    %v291 = vpop.f32.mrb[0].mxu0
    %v292 = vadd.f32 %v171, %v291
    %v293 = vpop.f32.mrb[0].mxu0
    %294 = vmatprep.mubr.bf16.mxu0 0
    %295 = vmatmul.mubr.bf16.gmra.mrb[0].mxu0 %v234
    %v296 = vpop.f32.mrb[0].mxu0
    %v297 = vadd.f32 %v176, %v296
    %v298 = vpop.f32.mrb[0].mxu0
    %v299 = vpop.f32.mrb[0].mxu0
    %v300 = vadd.f32 %v179, %v299
    %v301 = vpop.f32.mrb[0].mxu0
    %302 = vmatprep.mubr.bf16.mxu0 0
    %303 = vmatmul.mubr.bf16.gmra.mrb[0].mxu0 %v237
    %v304 = vpop.f32.mrb[0].mxu0
    %v305 = vadd.f32 %v184, %v304
    %v306 = vpop.f32.mrb[0].mxu0
    %v307 = vpop.f32.mrb[0].mxu0
    %v308 = vadd.f32 %v187, %v307
    %v309 = vpop.f32.mrb[0].mxu0
    %310 = vmatprep.mubr.bf16.mxu0 0
    %311 = vmatmul.mubr.bf16.gmra.mrb[0].mxu0 %v240
    %v312 = vpop.f32.mrb[0].mxu0
    %v313 = vadd.f32 %v192, %v312
    %v314 = vpop.f32.mrb[0].mxu0
    %v315 = vpop.f32.mrb[0].mxu0
    %v316 = vadd.f32 %v195, %v315
    %v317 = vpop.f32.mrb[0].mxu0
    %318 = vmatprep.mubr.bf16.mxu0 0
    %319 = vmatmul.mubr.bf16.gmra.mrb[0].mxu0 %v243
    %v320 = vpop.f32.mrb[0].mxu0
    %v321 = vadd.f32 %v200, %v320
    %v322 = vpop.f32.mrb[0].mxu0
    %v323 = vpop.f32.mrb[0].mxu0
    %v324 = vadd.f32 %v203, %v323
    %v325 = vpop.f32.mrb[0].mxu0
    %326 = vmatprep.mubr.bf16.mxu0 0
    %327 = vmatmul.mubr.bf16.gmra.mrb[0].mxu0 %v246
    %v328 = vpop.f32.mrb[0].mxu0
    %v329 = vadd.f32 %v208, %v328
    %v330 = vpop.f32.mrb[0].mxu0
    %v331 = vpop.f32.mrb[0].mxu0
    %v332 = vadd.f32 %v211, %v331
    %v333 = vpop.f32.mrb[0].mxu0
    %334 = vmatprep.mubr.bf16.mxu0 0
    %335 = vmatmul.mubr.bf16.gmra.mrb[0].mxu0 %v249
    %v336 = vpop.f32.mrb[0].mxu0
    %v337 = vadd.f32 %v216, %v336
    %v338 = vpop.f32.mrb[0].mxu0
    %v339 = vpop.f32.mrb[0].mxu0
    %v340 = vadd.f32 %v219, %v339
    %v341 = vpop.f32.mrb[0].mxu0
    %342 = vmatprep.mubr.bf16.mxu0 0
    %343 = vmatmul.mubr.bf16.gmra.mrb[0].mxu0 %v252
    %v344 = vpop.f32.mrb[0].mxu0
    %v345 = vadd.f32 %v224, %v344
    %v346 = vpop.f32.mrb[0].mxu0
    %v347 = vpop.f32.mrb[0].mxu0
    %v348 = vadd.f32 %v227, %v347
    %v349 = vpop.f32.mrb[0].mxu0
    %350 = vdwg.mxu0
    %v351 = vmul.f32 %v289, %v289
    %v352 = vmul.f32 %v292, %v292
    %v353 = vmul.f32 %v297, %v297
    %v354 = vmul.f32 %v300, %v300
    %v355 = vmul.f32 %v305, %v305
    %v356 = vmul.f32 %v308, %v308
    %v357 = vmul.f32 %v313, %v313
    %v358 = vmul.f32 %v316, %v316
    %v359 = vmul.f32 %v321, %v321
    %v360 = vmul.f32 %v324, %v324
    %v361 = vmul.f32 %v329, %v329
    %v362 = vmul.f32 %v332, %v332
    %v363 = vmul.f32 %v337, %v337
    %v364 = vmul.f32 %v340, %v340
    %v365 = vmul.f32 %v345, %v345
    %v366 = vmul.f32 %v348, %v348
    %383 = vrot.lane.b32.xlu0 %v351, 104
    %v384 = vpop.permute.xlu0 %383
    %385 = vrot.lane.b32.xlu0 %v352, 104
    %v386 = vpop.permute.xlu0 %385
    %387 = vrot.lane.b32.xlu0 %v353, 104
    %v388 = vpop.permute.xlu0 %387
    %389 = vrot.lane.b32.xlu0 %v354, 104
    %v390 = vpop.permute.xlu0 %389
    %391 = vrot.lane.b32.xlu0 %v355, 104
    %v392 = vpop.permute.xlu0 %391
    %393 = vrot.lane.b32.xlu0 %v356, 104
    %v394 = vpop.permute.xlu0 %393
    %395 = vrot.lane.b32.xlu0 %v357, 104
    %v396 = vpop.permute.xlu0 %395
    %397 = vrot.lane.b32.xlu0 %v358, 104
    %v398 = vpop.permute.xlu0 %397
    %399 = vrot.lane.b32.xlu0 %v359, 104
    %v400 = vpop.permute.xlu0 %399
    %401 = vrot.lane.b32.xlu0 %v360, 104
    %v402 = vpop.permute.xlu0 %401
    %403 = vrot.lane.b32.xlu0 %v361, 104
    %v404 = vpop.permute.xlu0 %403
    %405 = vrot.lane.b32.xlu0 %v362, 104
    %v406 = vpop.permute.xlu0 %405
    %407 = vrot.lane.b32.xlu0 %v363, 104
    %v408 = vpop.permute.xlu0 %407
    %409 = vrot.lane.b32.xlu0 %v364, 104
    %v410 = vpop.permute.xlu0 %409
    %411 = vrot.lane.b32.xlu0 %v365, 104
    %v412 = vpop.permute.xlu0 %411
    %413 = vrot.lane.b32.xlu0 %v366, 104
    %v414 = vpop.permute.xlu0 %413
    %v431 = vadd.f32 %v351, %v384
    %v432 = vadd.f32 %v352, %v386
    %v433 = vadd.f32 %v353, %v388
    %v434 = vadd.f32 %v354, %v390
    %v435 = vadd.f32 %v355, %v392
    %v436 = vadd.f32 %v356, %v394
    %v437 = vadd.f32 %v357, %v396
    %v438 = vadd.f32 %v358, %v398
    %v439 = vadd.f32 %v359, %v400
    %v440 = vadd.f32 %v360, %v402
    %v441 = vadd.f32 %v361, %v404
    %v442 = vadd.f32 %v362, %v406
    %v443 = vadd.f32 %v363, %v408
    %v444 = vadd.f32 %v364, %v410
    %v445 = vadd.f32 %v365, %v412
    %v446 = vadd.f32 %v366, %v414
    %447 = vrot.lane.b32.xlu0 %v351, 80
    %v448 = vpop.permute.xlu0 %447
    %449 = vrot.lane.b32.xlu0 %v352, 80
    %v450 = vpop.permute.xlu0 %449
    %451 = vrot.lane.b32.xlu0 %v353, 80
    %v452 = vpop.permute.xlu0 %451
    %453 = vrot.lane.b32.xlu0 %v354, 80
    %v454 = vpop.permute.xlu0 %453
    %455 = vrot.lane.b32.xlu0 %v355, 80
    %v456 = vpop.permute.xlu0 %455
    %457 = vrot.lane.b32.xlu0 %v356, 80
    %v458 = vpop.permute.xlu0 %457
    %459 = vrot.lane.b32.xlu0 %v357, 80
    %v460 = vpop.permute.xlu0 %459
    %461 = vrot.lane.b32.xlu0 %v358, 80
    %v462 = vpop.permute.xlu0 %461
    %463 = vrot.lane.b32.xlu0 %v359, 80
    %v464 = vpop.permute.xlu0 %463
    %465 = vrot.lane.b32.xlu0 %v360, 80
    %v466 = vpop.permute.xlu0 %465
    %467 = vrot.lane.b32.xlu0 %v361, 80
    %v468 = vpop.permute.xlu0 %467
    %469 = vrot.lane.b32.xlu0 %v362, 80
    %v470 = vpop.permute.xlu0 %469
    %471 = vrot.lane.b32.xlu0 %v363, 80
    %v472 = vpop.permute.xlu0 %471
    %473 = vrot.lane.b32.xlu0 %v364, 80
    %v474 = vpop.permute.xlu0 %473
    %475 = vrot.lane.b32.xlu0 %v365, 80
    %v476 = vpop.permute.xlu0 %475
    %477 = vrot.lane.b32.xlu0 %v366, 80
    %v478 = vpop.permute.xlu0 %477
    %v495 = vadd.f32 %v431, %v448
    %v496 = vadd.f32 %v432, %v450
    %v497 = vadd.f32 %v433, %v452
    %v498 = vadd.f32 %v434, %v454
    %v499 = vadd.f32 %v435, %v456
    %v500 = vadd.f32 %v436, %v458
    %v501 = vadd.f32 %v437, %v460
    %v502 = vadd.f32 %v438, %v462
    %v503 = vadd.f32 %v439, %v464
    %v504 = vadd.f32 %v440, %v466
    %v505 = vadd.f32 %v441, %v468
    %v506 = vadd.f32 %v442, %v470
    %v507 = vadd.f32 %v443, %v472
    %v508 = vadd.f32 %v444, %v474
    %v509 = vadd.f32 %v445, %v476
    %v510 = vadd.f32 %v446, %v478
    %v511 = vadd.f32 %v495, 1e-06
    %v512 = vadd.f32 %v496, 1e-06
    %v513 = vadd.f32 %v497, 1e-06
    %v514 = vadd.f32 %v498, 1e-06
    %v515 = vadd.f32 %v499, 1e-06
    %v516 = vadd.f32 %v500, 1e-06
    %v517 = vadd.f32 %v501, 1e-06
    %v518 = vadd.f32 %v502, 1e-06
    %v519 = vadd.f32 %v503, 1e-06
    %v520 = vadd.f32 %v504, 1e-06
    %v521 = vadd.f32 %v505, 1e-06
    %v522 = vadd.f32 %v506, 1e-06
    %v523 = vadd.f32 %v507, 1e-06
    %v524 = vadd.f32 %v508, 1e-06
    %v525 = vadd.f32 %v509, 1e-06
    %v526 = vadd.f32 %v510, 1e-06
    %v527 = vrsqrt.pop %v511
    %v528 = vmul.f32 %v511, %v527
    %vm529 = vcmp.eq.f32.partialorder %v511, inf
    %v530 = vsel %vm529, %v511, %v528
    %vm531 = vcmp.eq.f32.partialorder %v511, 0.0
    %v532 = vand.u32 %v511, 2147483648
    %v533 = vsel %vm531, %v532, %v530
    %v534 = vrsqrt.pop %v512
    %v535 = vmul.f32 %v512, %v534
    %vm536 = vcmp.eq.f32.partialorder %v512, inf
    %v537 = vsel %vm536, %v512, %v535
    %vm538 = vcmp.eq.f32.partialorder %v512, 0.0
    %v539 = vand.u32 %v512, 2147483648
    %v540 = vsel %vm538, %v539, %v537
    %v541 = vrsqrt.pop %v513
    %v542 = vmul.f32 %v513, %v541
    %vm543 = vcmp.eq.f32.partialorder %v513, inf
    %v544 = vsel %vm543, %v513, %v542
    %vm545 = vcmp.eq.f32.partialorder %v513, 0.0
    %v546 = vand.u32 %v513, 2147483648
    %v547 = vsel %vm545, %v546, %v544
    %v548 = vrsqrt.pop %v514
    %v549 = vmul.f32 %v514, %v548
    %vm550 = vcmp.eq.f32.partialorder %v514, inf
    %v551 = vsel %vm550, %v514, %v549
    %vm552 = vcmp.eq.f32.partialorder %v514, 0.0
    %v553 = vand.u32 %v514, 2147483648
    %v554 = vsel %vm552, %v553, %v551
    %v555 = vrsqrt.pop %v515
    %v556 = vmul.f32 %v515, %v555
    %vm557 = vcmp.eq.f32.partialorder %v515, inf
    %v558 = vsel %vm557, %v515, %v556
    %vm559 = vcmp.eq.f32.partialorder %v515, 0.0
    %v560 = vand.u32 %v515, 2147483648
    %v561 = vsel %vm559, %v560, %v558
    %v562 = vrsqrt.pop %v516
    %v563 = vmul.f32 %v516, %v562
    %vm564 = vcmp.eq.f32.partialorder %v516, inf
    %v565 = vsel %vm564, %v516, %v563
    %vm566 = vcmp.eq.f32.partialorder %v516, 0.0
    %v567 = vand.u32 %v516, 2147483648
    %v568 = vsel %vm566, %v567, %v565
    %v569 = vrsqrt.pop %v517
    %v570 = vmul.f32 %v517, %v569
    %vm571 = vcmp.eq.f32.partialorder %v517, inf
    %v572 = vsel %vm571, %v517, %v570
    %vm573 = vcmp.eq.f32.partialorder %v517, 0.0
    %v574 = vand.u32 %v517, 2147483648
    %v575 = vsel %vm573, %v574, %v572
    %v576 = vrsqrt.pop %v518
    %v577 = vmul.f32 %v518, %v576
    %vm578 = vcmp.eq.f32.partialorder %v518, inf
    %v579 = vsel %vm578, %v518, %v577
    %vm580 = vcmp.eq.f32.partialorder %v518, 0.0
    %v581 = vand.u32 %v518, 2147483648
    %v582 = vsel %vm580, %v581, %v579
    %v583 = vrsqrt.pop %v519
    %v584 = vmul.f32 %v519, %v583
    %vm585 = vcmp.eq.f32.partialorder %v519, inf
    %v586 = vsel %vm585, %v519, %v584
    %vm587 = vcmp.eq.f32.partialorder %v519, 0.0
    %v588 = vand.u32 %v519, 2147483648
    %v589 = vsel %vm587, %v588, %v586
    %v590 = vrsqrt.pop %v520
    %v591 = vmul.f32 %v520, %v590
    %vm592 = vcmp.eq.f32.partialorder %v520, inf
    %v593 = vsel %vm592, %v520, %v591
    %vm594 = vcmp.eq.f32.partialorder %v520, 0.0
    %v595 = vand.u32 %v520, 2147483648
    %v596 = vsel %vm594, %v595, %v593
    %v597 = vrsqrt.pop %v521
    %v598 = vmul.f32 %v521, %v597
    %vm599 = vcmp.eq.f32.partialorder %v521, inf
    %v600 = vsel %vm599, %v521, %v598
    %vm601 = vcmp.eq.f32.partialorder %v521, 0.0
    %v602 = vand.u32 %v521, 2147483648
    %v603 = vsel %vm601, %v602, %v600
    %v604 = vrsqrt.pop %v522
    %v605 = vmul.f32 %v522, %v604
    %vm606 = vcmp.eq.f32.partialorder %v522, inf
    %v607 = vsel %vm606, %v522, %v605
    %vm608 = vcmp.eq.f32.partialorder %v522, 0.0
    %v609 = vand.u32 %v522, 2147483648
    %v610 = vsel %vm608, %v609, %v607
    %v611 = vrsqrt.pop %v523
    %v612 = vmul.f32 %v523, %v611
    %vm613 = vcmp.eq.f32.partialorder %v523, inf
    %v614 = vsel %vm613, %v523, %v612
    %vm615 = vcmp.eq.f32.partialorder %v523, 0.0
    %v616 = vand.u32 %v523, 2147483648
    %v617 = vsel %vm615, %v616, %v614
    %v618 = vrsqrt.pop %v524
    %v619 = vmul.f32 %v524, %v618
    %vm620 = vcmp.eq.f32.partialorder %v524, inf
    %v621 = vsel %vm620, %v524, %v619
    %vm622 = vcmp.eq.f32.partialorder %v524, 0.0
    %v623 = vand.u32 %v524, 2147483648
    %v624 = vsel %vm622, %v623, %v621
    %v625 = vrsqrt.pop %v525
    %v626 = vmul.f32 %v525, %v625
    %vm627 = vcmp.eq.f32.partialorder %v525, inf
    %v628 = vsel %vm627, %v525, %v626
    %vm629 = vcmp.eq.f32.partialorder %v525, 0.0
    %v630 = vand.u32 %v525, 2147483648
    %v631 = vsel %vm629, %v630, %v628
    %v632 = vrsqrt.pop %v526
    %v633 = vmul.f32 %v526, %v632
    %vm634 = vcmp.eq.f32.partialorder %v526, inf
    %v635 = vsel %vm634, %v526, %v633
    %vm636 = vcmp.eq.f32.partialorder %v526, 0.0
    %v637 = vand.u32 %v526, 2147483648
    %v638 = vsel %vm636, %v637, %v635
    %v639 = vmul.f32 %v28, %v28
    %v640 = vmul.f32 %v29, %v29
    %v641 = vmul.f32 %v30, %v30
    %v642 = vmul.f32 %v31, %v31
    %v643 = vmul.f32 %v32, %v32
    %v644 = vmul.f32 %v33, %v33
    %v645 = vmul.f32 %v34, %v34
    %v646 = vmul.f32 %v35, %v35
    %v647 = vmul.f32 %v36, %v36
    %v648 = vmul.f32 %v37, %v37
    %v649 = vmul.f32 %v38, %v38
    %v650 = vmul.f32 %v39, %v39
    %v651 = vmul.f32 %v40, %v40
    %v652 = vmul.f32 %v41, %v41
    %v653 = vmul.f32 %v42, %v42
    %v654 = vmul.f32 %v43, %v43
    %671 = vrot.lane.b32.xlu0 %v533, 24
    %v672 = vpop.permute.xlu0 %671
    %673 = vrot.lane.b32.xlu0 %v540, 24
    %v674 = vpop.permute.xlu0 %673
    %675 = vrot.lane.b32.xlu0 %v547, 24
    %v676 = vpop.permute.xlu0 %675
    %677 = vrot.lane.b32.xlu0 %v554, 24
    %v678 = vpop.permute.xlu0 %677
    %679 = vrot.lane.b32.xlu0 %v561, 24
    %v680 = vpop.permute.xlu0 %679
    %681 = vrot.lane.b32.xlu0 %v568, 24
    %v682 = vpop.permute.xlu0 %681
    %683 = vrot.lane.b32.xlu0 %v575, 24
    %v684 = vpop.permute.xlu0 %683
    %685 = vrot.lane.b32.xlu0 %v582, 24
    %v686 = vpop.permute.xlu0 %685
    %687 = vrot.lane.b32.xlu0 %v589, 24
    %v688 = vpop.permute.xlu0 %687
    %689 = vrot.lane.b32.xlu0 %v596, 24
    %v690 = vpop.permute.xlu0 %689
    %691 = vrot.lane.b32.xlu0 %v603, 24
    %v692 = vpop.permute.xlu0 %691
    %693 = vrot.lane.b32.xlu0 %v610, 24
    %v694 = vpop.permute.xlu0 %693
    %695 = vrot.lane.b32.xlu0 %v617, 24
    %v696 = vpop.permute.xlu0 %695
    %697 = vrot.lane.b32.xlu0 %v624, 24
    %v698 = vpop.permute.xlu0 %697
    %699 = vrot.lane.b32.xlu0 %v631, 24
    %v700 = vpop.permute.xlu0 %699
    %701 = vrot.lane.b32.xlu0 %v638, 24
    %v702 = vpop.permute.xlu0 %701
    %735 = vrot.lane.b32.xlu0 %v639, 33
    %v736 = vpop.permute.xlu0 %735
    %737 = vrot.lane.b32.xlu0 %v640, 33
    %v738 = vpop.permute.xlu0 %737
    %739 = vrot.lane.b32.xlu0 %v641, 33
    %v740 = vpop.permute.xlu0 %739
    %741 = vrot.lane.b32.xlu0 %v642, 33
    %v742 = vpop.permute.xlu0 %741
    %743 = vrot.lane.b32.xlu0 %v643, 33
    %v744 = vpop.permute.xlu0 %743
    %745 = vrot.lane.b32.xlu0 %v644, 33
    %v746 = vpop.permute.xlu0 %745
    %747 = vrot.lane.b32.xlu0 %v645, 33
    %v748 = vpop.permute.xlu0 %747
    %749 = vrot.lane.b32.xlu0 %v646, 33
    %v750 = vpop.permute.xlu0 %749
    %751 = vrot.lane.b32.xlu0 %v647, 33
    %v752 = vpop.permute.xlu0 %751
    %753 = vrot.lane.b32.xlu0 %v648, 33
    %v754 = vpop.permute.xlu0 %753
    %755 = vrot.lane.b32.xlu0 %v649, 33
    %v756 = vpop.permute.xlu0 %755
    %757 = vrot.lane.b32.xlu0 %v650, 33
    %v758 = vpop.permute.xlu0 %757
    %759 = vrot.lane.b32.xlu0 %v651, 33
    %v760 = vpop.permute.xlu0 %759
    %761 = vrot.lane.b32.xlu0 %v652, 33
    %v762 = vpop.permute.xlu0 %761
    %763 = vrot.lane.b32.xlu0 %v653, 33
    %v764 = vpop.permute.xlu0 %763
    %765 = vrot.lane.b32.xlu0 %v654, 33
    %v766 = vpop.permute.xlu0 %765
    %799 = vrot.lane.b32.xlu0 %v28, 34
    %v800 = vpop.permute.xlu0 %799
    %801 = vrot.lane.b32.xlu0 %v29, 34
    %v802 = vpop.permute.xlu0 %801
    %803 = vrot.lane.b32.xlu0 %v30, 34
    %v804 = vpop.permute.xlu0 %803
    %805 = vrot.lane.b32.xlu0 %v31, 34
    %v806 = vpop.permute.xlu0 %805
    %807 = vrot.lane.b32.xlu0 %v32, 34
    %v808 = vpop.permute.xlu0 %807
    %809 = vrot.lane.b32.xlu0 %v33, 34
    %v810 = vpop.permute.xlu0 %809
    %811 = vrot.lane.b32.xlu0 %v34, 34
    %v812 = vpop.permute.xlu0 %811
    %813 = vrot.lane.b32.xlu0 %v35, 34
    %v814 = vpop.permute.xlu0 %813
    %815 = vrot.lane.b32.xlu0 %v36, 34
    %v816 = vpop.permute.xlu0 %815
    %817 = vrot.lane.b32.xlu0 %v37, 34
    %v818 = vpop.permute.xlu0 %817
    %819 = vrot.lane.b32.xlu0 %v38, 34
    %v820 = vpop.permute.xlu0 %819
    %821 = vrot.lane.b32.xlu0 %v39, 34
    %v822 = vpop.permute.xlu0 %821
    %823 = vrot.lane.b32.xlu0 %v40, 34
    %v824 = vpop.permute.xlu0 %823
    %825 = vrot.lane.b32.xlu0 %v41, 34
    %v826 = vpop.permute.xlu0 %825
    %827 = vrot.lane.b32.xlu0 %v42, 34
    %v828 = vpop.permute.xlu0 %827
    %829 = vrot.lane.b32.xlu0 %v43, 34
    %v830 = vpop.permute.xlu0 %829
    %vm847 = vcmask 195584
    %v848 = vsel %vm847, %v511, %v672
    %v849 = vsel %vm847, %v512, %v674
    %v850 = vsel %vm847, %v513, %v676
    %v851 = vsel %vm847, %v514, %v678
    %v852 = vsel %vm847, %v515, %v680
    %v853 = vsel %vm847, %v516, %v682
    %v854 = vsel %vm847, %v517, %v684
    %v855 = vsel %vm847, %v518, %v686
    %v856 = vsel %vm847, %v519, %v688
    %v857 = vsel %vm847, %v520, %v690
    %v858 = vsel %vm847, %v521, %v692
    %v859 = vsel %vm847, %v522, %v694
    %v860 = vsel %vm847, %v523, %v696
    %v861 = vsel %vm847, %v524, %v698
    %v862 = vsel %vm847, %v525, %v700
    %v863 = vsel %vm847, %v526, %v702
    %vm864 = vcmask 392192
    %v865 = vsel %vm864, %v848, %v736
    %v866 = vsel %vm864, %v849, %v738
    %v867 = vsel %vm864, %v850, %v740
    %v868 = vsel %vm864, %v851, %v742
    %v869 = vsel %vm864, %v852, %v744
    %v870 = vsel %vm864, %v853, %v746
    %v871 = vsel %vm864, %v854, %v748
    %v872 = vsel %vm864, %v855, %v750
    %v873 = vsel %vm864, %v856, %v752
    %v874 = vsel %vm864, %v857, %v754
    %v875 = vsel %vm864, %v858, %v756
    %v876 = vsel %vm864, %v859, %v758
    %v877 = vsel %vm864, %v860, %v760
    %v878 = vsel %vm864, %v861, %v762
    %v879 = vsel %vm864, %v862, %v764
    %v880 = vsel %vm864, %v863, %v766
    %vm881 = vcmask 400384
    %v882 = vsel %vm881, %v865, %v800
    %v883 = vsel %vm881, %v866, %v802
    %v884 = vsel %vm881, %v867, %v804
    %v885 = vsel %vm881, %v868, %v806
    %v886 = vsel %vm881, %v869, %v808
    %v887 = vsel %vm881, %v870, %v810
    %v888 = vsel %vm881, %v871, %v812
    %v889 = vsel %vm881, %v872, %v814
    %v890 = vsel %vm881, %v873, %v816
    %v891 = vsel %vm881, %v874, %v818
    %v892 = vsel %vm881, %v875, %v820
    %v893 = vsel %vm881, %v876, %v822
    %v894 = vsel %vm881, %v877, %v824
    %v895 = vsel %vm881, %v878, %v826
    %v896 = vsel %vm881, %v879, %v828
    %v897 = vsel %vm881, %v880, %v830
    %vm898 = vcmask 408576
    %v899 = vsel %vm898, %v882, 1.0
    %v900 = vsel %vm898, %v883, 1.0
    %v901 = vsel %vm898, %v884, 1.0
    %v902 = vsel %vm898, %v885, 1.0
    %v903 = vsel %vm898, %v886, 1.0
    %v904 = vsel %vm898, %v887, 1.0
    %v905 = vsel %vm898, %v888, 1.0
    %v906 = vsel %vm898, %v889, 1.0
    %v907 = vsel %vm898, %v890, 1.0
    %v908 = vsel %vm898, %v891, 1.0
    %v909 = vsel %vm898, %v892, 1.0
    %v910 = vsel %vm898, %v893, 1.0
    %v911 = vsel %vm898, %v894, 1.0
    %v912 = vsel %vm898, %v895, 1.0
    %v913 = vsel %vm898, %v896, 1.0
    %v914 = vsel %vm898, %v897, 1.0
    %v915 = vld [vmem:[%s2] sm:$0xff]
    %v916 = vld [vmem:[%s2 + $0x8] sm:$0xff]
    %v917 = vld [vmem:[%s2 + $0x10] sm:$0xff]
    %v918 = vld [vmem:[%s2 + $0x18] sm:$0xff]
    %v919 = vld [vmem:[%s2 + $0x20] sm:$0xff]
    %v920 = vld [vmem:[%s2 + $0x28] sm:$0xff]
    %v921 = vld [vmem:[%s2 + $0x30] sm:$0xff]
    %v922 = vld [vmem:[%s2 + $0x38] sm:$0xff]
    %v923 = vld [vmem:[%s2 + $0x40] sm:$0xff]
    %v924 = vld [vmem:[%s2 + $0x48] sm:$0xff]
    %v925 = vld [vmem:[%s2 + $0x50] sm:$0xff]
    %v926 = vld [vmem:[%s2 + $0x58] sm:$0xff]
    %v927 = vld [vmem:[%s2 + $0x60] sm:$0xff]
    %v928 = vld [vmem:[%s2 + $0x68] sm:$0xff]
    %v929 = vld [vmem:[%s2 + $0x70] sm:$0xff]
    %v930 = vld [vmem:[%s2 + $0x78] sm:$0xff]
    %v931 = vld [vmem:[%s2 + $0x80] sm:$0xff]
    %v932 = vld [vmem:[%s2 + $0x88] sm:$0xff]
    %v933 = vld [vmem:[%s2 + $0x90] sm:$0xff]
    %v934 = vld [vmem:[%s2 + $0x98] sm:$0xff]
    %v935 = vld [vmem:[%s2 + $0xa0] sm:$0xff]
    %v936 = vld [vmem:[%s2 + $0xa8] sm:$0xff]
    %v937 = vld [vmem:[%s2 + $0xb0] sm:$0xff]
    %v938 = vld [vmem:[%s2 + $0xb8] sm:$0xff]
    %v939 = vld [vmem:[%s2 + $0xc0] sm:$0x7]
    %v940 = vld [vmem:[%s2 + $0xc8] sm:$0x7]
    %v941 = vld [vmem:[%s2 + $0xd0] sm:$0x7]
    %v942 = vld [vmem:[%s2 + $0xd8] sm:$0x7]
    %vm943 = vcmask 416768
    %v945 = vsel %vm943, %v899, 0
    %v948 = vsel %vm943, %v900, 0
    %v951 = vsel %vm943, %v901, 0
    %v954 = vsel %vm943, %v902, 0
    %v957 = vsel %vm943, %v903, 0
    %v960 = vsel %vm943, %v904, 0
    %v963 = vsel %vm943, %v905, 0
    %v966 = vsel %vm943, %v906, 0
    %v969 = vsel %vm943, %v907, 0
    %v972 = vsel %vm943, %v908, 0
    %v975 = vsel %vm943, %v909, 0
    %v978 = vsel %vm943, %v910, 0
    %v981 = vsel %vm943, %v911, 0
    %v984 = vsel %vm943, %v912, 0
    %v987 = vsel %vm943, %v913, 0
    %v990 = vsel %vm943, %v914, 0
    %vm992 = vcmask 1042432
    %v994 = vsel %vm992, %v939, 0
    %v997 = vsel %vm992, %v940, 0
    %v1000 = vsel %vm992, %v941, 0
    %v1003 = vsel %vm992, %v942, 0
    %1005 = vmatprep.subr.mxu0 %v916
    %1006 = vmatpush1.msra.mxu0 %v915
    %1007 = vmatprep.subr.mxu0 %v920
    %1008 = vmatpush1.msra.mxu0 %v919
    %1009 = vmatprep.subr.mxu0 %v924
    %1010 = vmatpush1.msra.mxu0 %v923
    %1011 = vmatprep.subr.mxu0 %v928
    %1012 = vmatpush1.msra.mxu0 %v927
    %1013 = vmatprep.subr.mxu0 %v932
    %1014 = vmatpush1.msra.mxu0 %v931
    %1015 = vmatprep.subr.mxu0 %v936
    %1016 = vmatpush1.msra.mxu0 %v935
    %1017 = vmatprep.subr.mxu0 %v997
    %1018 = vmatpush1.msra.mxu0 %v994
    %1019 = vmatprep.subr.mxu0 0.0
    %1020 = vmatpush1.msra.mxu0 0.0
    %1021 = vmatprep.subr.mxu0 0.0
    %1022 = vmatpush1.msra.mxu0 0.0
    %1023 = vmatprep.subr.mxu0 0.0
    %1024 = vmatpush1.msra.mxu0 0.0
    %1025 = vmatprep.subr.mxu0 0.0
    %1026 = vmatpush1.msra.mxu0 0.0
    %1027 = vmatprep.subr.mxu0 0.0
    %1028 = vmatpush1.msra.mxu0 0.0
    %1029 = vmatprep.subr.mxu0 0.0
    %1030 = vmatpush1.msra.mxu0 0.0
    %1031 = vmatprep.subr.mxu0 0.0
    %1032 = vmatpush1.msra.mxu0 0.0
    %1033 = vmatprep.subr.mxu0 0.0
    %1034 = vmatpush1.msra.mxu0 0.0
    %1035 = vmatprep.subr.mxu0 0.0
    %1036 = vmatpush1.msra.mxu0 0.0
    %1037 = vmatprep.subr.mxu0 0.0
    %1038 = vmatpush1.msra.mxu0 0.0
    %1039 = vmatprep.subr.mxu0 0.0
    %1040 = vmatpush1.msra.mxu0 0.0
    %1041 = vmatprep.subr.mxu0 0.0
    %1042 = vmatpush1.msra.mxu0 0.0
    %1043 = vmatprep.subr.mxu0 0.0
    %1044 = vmatpush1.msra.mxu0 0.0
    %1045 = vmatprep.subr.mxu0 0.0
    %1046 = vmatpush1.msra.mxu0 0.0
    %1047 = vmatprep.subr.mxu0 0.0
    %1048 = vmatpush1.msra.mxu0 0.0
    %1049 = vmatprep.subr.mxu0 0.0
    %1050 = vmatpush1.msra.mxu0 0.0
    %1051 = vmatprep.subr.mxu0 0.0
    %1052 = vmatpush1.msra.mxu0 0.0
    %1053 = vmatprep.subr.mxu0 0.0
    %1054 = vmatpush1.msra.mxu0 0.0
    %1055 = vmatprep.subr.mxu0 0.0
    %1056 = vmatpush1.msra.mxu0 0.0
    %1057 = vmatprep.subr.mxu0 0.0
    %1058 = vmatpush1.msra.mxu0 0.0
    %1059 = vmatprep.subr.mxu0 0.0
    %1060 = vmatpush1.msra.mxu0 0.0
    %1061 = vmatprep.subr.mxu0 0.0
    %1062 = vmatpush1.msra.mxu0 0.0
    %1063 = vmatprep.subr.mxu0 0.0
    %1064 = vmatpush1.msra.mxu0 0.0
    %1065 = vmatprep.subr.mxu0 0.0
    %1066 = vmatpush1.msra.mxu0 0.0
    %1067 = vmatprep.subr.mxu0 0.0
    %1068 = vmatpush1.msra.mxu0 0.0
    %1069 = vmatprep.mubr.f32.mxu0 0.0
    %1070 = vmatmul.mubr.f32.gmra.mrb[0].mxu0 %v945
    %v1071 = vpop.f32.mrb[0].mxu0
    %v1072 = vadd.f32 0.0, %v1071
    %v1073 = vpop.f32.mrb[0].mxu0
    %v1074 = vadd.f32 0.0, %v1073
    %1075 = vmatprep.mubr.f32.mxu0 0.0
    %1076 = vmatmul.mubr.f32.gmra.mrb[0].mxu0 %v948
    %v1077 = vpop.f32.mrb[0].mxu0
    %v1078 = vadd.f32 0.0, %v1077
    %v1079 = vpop.f32.mrb[0].mxu0
    %v1080 = vadd.f32 0.0, %v1079
    %1081 = vmatprep.mubr.f32.mxu0 0.0
    %1082 = vmatmul.mubr.f32.gmra.mrb[0].mxu0 %v951
    %v1083 = vpop.f32.mrb[0].mxu0
    %v1084 = vadd.f32 0.0, %v1083
    %v1085 = vpop.f32.mrb[0].mxu0
    %v1086 = vadd.f32 0.0, %v1085
    %1087 = vmatprep.mubr.f32.mxu0 0.0
    %1088 = vmatmul.mubr.f32.gmra.mrb[0].mxu0 %v954
    %v1089 = vpop.f32.mrb[0].mxu0
    %v1090 = vadd.f32 0.0, %v1089
    %v1091 = vpop.f32.mrb[0].mxu0
    %v1092 = vadd.f32 0.0, %v1091
    %1093 = vmatprep.mubr.f32.mxu0 0.0
    %1094 = vmatmul.mubr.f32.gmra.mrb[0].mxu0 %v957
    %v1095 = vpop.f32.mrb[0].mxu0
    %v1096 = vadd.f32 0.0, %v1095
    %v1097 = vpop.f32.mrb[0].mxu0
    %v1098 = vadd.f32 0.0, %v1097
    %1099 = vmatprep.mubr.f32.mxu0 0.0
    %1100 = vmatmul.mubr.f32.gmra.mrb[0].mxu0 %v960
    %v1101 = vpop.f32.mrb[0].mxu0
    %v1102 = vadd.f32 0.0, %v1101
    %v1103 = vpop.f32.mrb[0].mxu0
    %v1104 = vadd.f32 0.0, %v1103
    %1105 = vmatprep.mubr.f32.mxu0 0.0
    %1106 = vmatmul.mubr.f32.gmra.mrb[0].mxu0 %v963
    %v1107 = vpop.f32.mrb[0].mxu0
    %v1108 = vadd.f32 0.0, %v1107
    %v1109 = vpop.f32.mrb[0].mxu0
    %v1110 = vadd.f32 0.0, %v1109
    %1111 = vmatprep.mubr.f32.mxu0 0.0
    %1112 = vmatmul.mubr.f32.gmra.mrb[0].mxu0 %v966
    %v1113 = vpop.f32.mrb[0].mxu0
    %v1114 = vadd.f32 0.0, %v1113
    %v1115 = vpop.f32.mrb[0].mxu0
    %v1116 = vadd.f32 0.0, %v1115
    %1117 = vmatprep.mubr.f32.mxu0 0.0
    %1118 = vmatmul.mubr.f32.gmra.mrb[0].mxu0 %v969
    %v1119 = vpop.f32.mrb[0].mxu0
    %v1120 = vadd.f32 0.0, %v1119
    %v1121 = vpop.f32.mrb[0].mxu0
    %v1122 = vadd.f32 0.0, %v1121
    %1123 = vmatprep.mubr.f32.mxu0 0.0
    %1124 = vmatmul.mubr.f32.gmra.mrb[0].mxu0 %v972
    %v1125 = vpop.f32.mrb[0].mxu0
    %v1126 = vadd.f32 0.0, %v1125
    %v1127 = vpop.f32.mrb[0].mxu0
    %v1128 = vadd.f32 0.0, %v1127
    %1129 = vmatprep.mubr.f32.mxu0 0.0
    %1130 = vmatmul.mubr.f32.gmra.mrb[0].mxu0 %v975
    %v1131 = vpop.f32.mrb[0].mxu0
    %v1132 = vadd.f32 0.0, %v1131
    %v1133 = vpop.f32.mrb[0].mxu0
    %v1134 = vadd.f32 0.0, %v1133
    %1135 = vmatprep.mubr.f32.mxu0 0.0
    %1136 = vmatmul.mubr.f32.gmra.mrb[0].mxu0 %v978
    %v1137 = vpop.f32.mrb[0].mxu0
    %v1138 = vadd.f32 0.0, %v1137
    %v1139 = vpop.f32.mrb[0].mxu0
    %v1140 = vadd.f32 0.0, %v1139
    %1141 = vmatprep.mubr.f32.mxu0 0.0
    %1142 = vmatmul.mubr.f32.gmra.mrb[0].mxu0 %v981
    %v1143 = vpop.f32.mrb[0].mxu0
    %v1144 = vadd.f32 0.0, %v1143
    %v1145 = vpop.f32.mrb[0].mxu0
    %v1146 = vadd.f32 0.0, %v1145
    %1147 = vmatprep.mubr.f32.mxu0 0.0
    %1148 = vmatmul.mubr.f32.gmra.mrb[0].mxu0 %v984
    %v1149 = vpop.f32.mrb[0].mxu0
    %v1150 = vadd.f32 0.0, %v1149
    %v1151 = vpop.f32.mrb[0].mxu0
    %v1152 = vadd.f32 0.0, %v1151
    %1153 = vmatprep.mubr.f32.mxu0 0.0
    %1154 = vmatmul.mubr.f32.gmra.mrb[0].mxu0 %v987
    %v1155 = vpop.f32.mrb[0].mxu0
    %v1156 = vadd.f32 0.0, %v1155
    %v1157 = vpop.f32.mrb[0].mxu0
    %v1158 = vadd.f32 0.0, %v1157
    %1159 = vmatprep.mubr.f32.mxu0 0.0
    %1160 = vmatmul.mubr.f32.gmra.mrb[0].mxu0 %v990
    %v1161 = vpop.f32.mrb[0].mxu0
    %v1162 = vadd.f32 0.0, %v1161
    %v1163 = vpop.f32.mrb[0].mxu0
    %v1164 = vadd.f32 0.0, %v1163
    %1165 = vdwg.mxu0
    %1166 = vmatprep.subr.mxu0 %v918
    %1167 = vmatpush1.msra.mxu0 %v917
    %1168 = vmatprep.subr.mxu0 %v922
    %1169 = vmatpush1.msra.mxu0 %v921
    %1170 = vmatprep.subr.mxu0 %v926
    %1171 = vmatpush1.msra.mxu0 %v925
    %1172 = vmatprep.subr.mxu0 %v930
    %1173 = vmatpush1.msra.mxu0 %v929
    %1174 = vmatprep.subr.mxu0 %v934
    %1175 = vmatpush1.msra.mxu0 %v933
    %1176 = vmatprep.subr.mxu0 %v938
    %1177 = vmatpush1.msra.mxu0 %v937
    %1178 = vmatprep.subr.mxu0 %v1003
    %1179 = vmatpush1.msra.mxu0 %v1000
    %1180 = vmatprep.subr.mxu0 0.0
    %1181 = vmatpush1.msra.mxu0 0.0
    %1182 = vmatprep.subr.mxu0 0.0
    %1183 = vmatpush1.msra.mxu0 0.0
    %1184 = vmatprep.subr.mxu0 0.0
    %1185 = vmatpush1.msra.mxu0 0.0
    %1186 = vmatprep.subr.mxu0 0.0
    %1187 = vmatpush1.msra.mxu0 0.0
    %1188 = vmatprep.subr.mxu0 0.0
    %1189 = vmatpush1.msra.mxu0 0.0
    %1190 = vmatprep.subr.mxu0 0.0
    %1191 = vmatpush1.msra.mxu0 0.0
    %1192 = vmatprep.subr.mxu0 0.0
    %1193 = vmatpush1.msra.mxu0 0.0
    %1194 = vmatprep.subr.mxu0 0.0
    %1195 = vmatpush1.msra.mxu0 0.0
    %1196 = vmatprep.subr.mxu0 0.0
    %1197 = vmatpush1.msra.mxu0 0.0
    %1198 = vmatprep.subr.mxu0 0.0
    %1199 = vmatpush1.msra.mxu0 0.0
    %1200 = vmatprep.subr.mxu0 0.0
    %1201 = vmatpush1.msra.mxu0 0.0
    %1202 = vmatprep.subr.mxu0 0.0
    %1203 = vmatpush1.msra.mxu0 0.0
    %1204 = vmatprep.subr.mxu0 0.0
    %1205 = vmatpush1.msra.mxu0 0.0
    %1206 = vmatprep.subr.mxu0 0.0
    %1207 = vmatpush1.msra.mxu0 0.0
    %1208 = vmatprep.subr.mxu0 0.0
    %1209 = vmatpush1.msra.mxu0 0.0
    %1210 = vmatprep.subr.mxu0 0.0
    %1211 = vmatpush1.msra.mxu0 0.0
    %1212 = vmatprep.subr.mxu0 0.0
    %1213 = vmatpush1.msra.mxu0 0.0
    %1214 = vmatprep.subr.mxu0 0.0
    %1215 = vmatpush1.msra.mxu0 0.0
    %1216 = vmatprep.subr.mxu0 0.0
    %1217 = vmatpush1.msra.mxu0 0.0
    %1218 = vmatprep.subr.mxu0 0.0
    %1219 = vmatpush1.msra.mxu0 0.0
    %1220 = vmatprep.subr.mxu0 0.0
    %1221 = vmatpush1.msra.mxu0 0.0
    %1222 = vmatprep.subr.mxu0 0.0
    %1223 = vmatpush1.msra.mxu0 0.0
    %1224 = vmatprep.subr.mxu0 0.0
    %1225 = vmatpush1.msra.mxu0 0.0
    %1226 = vmatprep.subr.mxu0 0.0
    %1227 = vmatpush1.msra.mxu0 0.0
    %1228 = vmatprep.subr.mxu0 0.0
    %1229 = vmatpush1.msra.mxu0 0.0
    %1230 = vmatprep.mubr.f32.mxu0 0.0
    %1231 = vmatmul.mubr.f32.gmra.mrb[0].mxu0 %v945
    %v1232 = vpop.f32.mrb[0].mxu0
    %v1233 = vadd.f32 0.0, %v1232
    %v1234 = vpop.f32.mrb[0].mxu0
    %v1235 = vadd.f32 0.0, %v1234
    %1236 = vmatprep.mubr.f32.mxu0 0.0
    %1237 = vmatmul.mubr.f32.gmra.mrb[0].mxu0 %v948
    %v1238 = vpop.f32.mrb[0].mxu0
    %v1239 = vadd.f32 0.0, %v1238
    %v1240 = vpop.f32.mrb[0].mxu0
    %v1241 = vadd.f32 0.0, %v1240
    %1242 = vmatprep.mubr.f32.mxu0 0.0
    %1243 = vmatmul.mubr.f32.gmra.mrb[0].mxu0 %v951
    %v1244 = vpop.f32.mrb[0].mxu0
    %v1245 = vadd.f32 0.0, %v1244
    %v1246 = vpop.f32.mrb[0].mxu0
    %v1247 = vadd.f32 0.0, %v1246
    %1248 = vmatprep.mubr.f32.mxu0 0.0
    %1249 = vmatmul.mubr.f32.gmra.mrb[0].mxu0 %v954
    %v1250 = vpop.f32.mrb[0].mxu0
    %v1251 = vadd.f32 0.0, %v1250
    %v1252 = vpop.f32.mrb[0].mxu0
    %v1253 = vadd.f32 0.0, %v1252
    %1254 = vmatprep.mubr.f32.mxu0 0.0
    %1255 = vmatmul.mubr.f32.gmra.mrb[0].mxu0 %v957
    %v1256 = vpop.f32.mrb[0].mxu0
    %v1257 = vadd.f32 0.0, %v1256
    %v1258 = vpop.f32.mrb[0].mxu0
    %v1259 = vadd.f32 0.0, %v1258
    %1260 = vmatprep.mubr.f32.mxu0 0.0
    %1261 = vmatmul.mubr.f32.gmra.mrb[0].mxu0 %v960
    %v1262 = vpop.f32.mrb[0].mxu0
    %v1263 = vadd.f32 0.0, %v1262
    %v1264 = vpop.f32.mrb[0].mxu0
    %v1265 = vadd.f32 0.0, %v1264
    %1266 = vmatprep.mubr.f32.mxu0 0.0
    %1267 = vmatmul.mubr.f32.gmra.mrb[0].mxu0 %v963
    %v1268 = vpop.f32.mrb[0].mxu0
    %v1269 = vadd.f32 0.0, %v1268
    %v1270 = vpop.f32.mrb[0].mxu0
    %v1271 = vadd.f32 0.0, %v1270
    %1272 = vmatprep.mubr.f32.mxu0 0.0
    %1273 = vmatmul.mubr.f32.gmra.mrb[0].mxu0 %v966
    %v1274 = vpop.f32.mrb[0].mxu0
    %v1275 = vadd.f32 0.0, %v1274
    %v1276 = vpop.f32.mrb[0].mxu0
    %v1277 = vadd.f32 0.0, %v1276
    %1278 = vmatprep.mubr.f32.mxu0 0.0
    %1279 = vmatmul.mubr.f32.gmra.mrb[0].mxu0 %v969
    %v1280 = vpop.f32.mrb[0].mxu0
    %v1281 = vadd.f32 0.0, %v1280
    %v1282 = vpop.f32.mrb[0].mxu0
    %v1283 = vadd.f32 0.0, %v1282
    %1284 = vmatprep.mubr.f32.mxu0 0.0
    %1285 = vmatmul.mubr.f32.gmra.mrb[0].mxu0 %v972
    %v1286 = vpop.f32.mrb[0].mxu0
    %v1287 = vadd.f32 0.0, %v1286
    %v1288 = vpop.f32.mrb[0].mxu0
    %v1289 = vadd.f32 0.0, %v1288
    %1290 = vmatprep.mubr.f32.mxu0 0.0
    %1291 = vmatmul.mubr.f32.gmra.mrb[0].mxu0 %v975
    %v1292 = vpop.f32.mrb[0].mxu0
    %v1293 = vadd.f32 0.0, %v1292
    %v1294 = vpop.f32.mrb[0].mxu0
    %v1295 = vadd.f32 0.0, %v1294
    %1296 = vmatprep.mubr.f32.mxu0 0.0
    %1297 = vmatmul.mubr.f32.gmra.mrb[0].mxu0 %v978
    %v1298 = vpop.f32.mrb[0].mxu0
    %v1299 = vadd.f32 0.0, %v1298
    %v1300 = vpop.f32.mrb[0].mxu0
    %v1301 = vadd.f32 0.0, %v1300
    %1302 = vmatprep.mubr.f32.mxu0 0.0
    %1303 = vmatmul.mubr.f32.gmra.mrb[0].mxu0 %v981
    %v1304 = vpop.f32.mrb[0].mxu0
    %v1305 = vadd.f32 0.0, %v1304
    %v1306 = vpop.f32.mrb[0].mxu0
    %v1307 = vadd.f32 0.0, %v1306
    %1308 = vmatprep.mubr.f32.mxu0 0.0
    %1309 = vmatmul.mubr.f32.gmra.mrb[0].mxu0 %v984
    %v1310 = vpop.f32.mrb[0].mxu0
    %v1311 = vadd.f32 0.0, %v1310
    %v1312 = vpop.f32.mrb[0].mxu0
    %v1313 = vadd.f32 0.0, %v1312
    %1314 = vmatprep.mubr.f32.mxu0 0.0
    %1315 = vmatmul.mubr.f32.gmra.mrb[0].mxu0 %v987
    %v1316 = vpop.f32.mrb[0].mxu0
    %v1317 = vadd.f32 0.0, %v1316
    %v1318 = vpop.f32.mrb[0].mxu0
    %v1319 = vadd.f32 0.0, %v1318
    %1320 = vmatprep.mubr.f32.mxu0 0.0
    %1321 = vmatmul.mubr.f32.gmra.mrb[0].mxu0 %v990
    %v1322 = vpop.f32.mrb[0].mxu0
    %v1323 = vadd.f32 0.0, %v1322
    %v1324 = vpop.f32.mrb[0].mxu0
    %v1325 = vadd.f32 0.0, %v1324
    %1326 = vdwg.mxu0
    %v1327 = vmul.f32 %v1072, 1.442695
    %v1328 = vpow.pop %v1327
    %v1329 = vmul.f32 %v1074, 1.442695
    %v1330 = vpow.pop %v1329
    %v1331 = vmul.f32 %v1233, 1.442695
    %v1332 = vpow.pop %v1331
    %v1333 = vmul.f32 %v1235, 1.442695
    %v1334 = vpow.pop %v1333
    %v1335 = vmul.f32 %v1078, 1.442695
    %v1336 = vpow.pop %v1335
    %v1337 = vmul.f32 %v1080, 1.442695
    %v1338 = vpow.pop %v1337
    %v1339 = vmul.f32 %v1239, 1.442695
    %v1340 = vpow.pop %v1339
    %v1341 = vmul.f32 %v1241, 1.442695
    %v1342 = vpow.pop %v1341
    %v1343 = vmul.f32 %v1084, 1.442695
    %v1344 = vpow.pop %v1343
    %v1345 = vmul.f32 %v1086, 1.442695
    %v1346 = vpow.pop %v1345
    %v1347 = vmul.f32 %v1245, 1.442695
    %v1348 = vpow.pop %v1347
    %v1349 = vmul.f32 %v1247, 1.442695
    %v1350 = vpow.pop %v1349
    %v1351 = vmul.f32 %v1090, 1.442695
    %v1352 = vpow.pop %v1351
    %v1353 = vmul.f32 %v1092, 1.442695
    %v1354 = vpow.pop %v1353
    %v1355 = vmul.f32 %v1251, 1.442695
    %v1356 = vpow.pop %v1355
    %v1357 = vmul.f32 %v1253, 1.442695
    %v1358 = vpow.pop %v1357
    %v1359 = vmul.f32 %v1096, 1.442695
    %v1360 = vpow.pop %v1359
    %v1361 = vmul.f32 %v1098, 1.442695
    %v1362 = vpow.pop %v1361
    %v1363 = vmul.f32 %v1257, 1.442695
    %v1364 = vpow.pop %v1363
    %v1365 = vmul.f32 %v1259, 1.442695
    %v1366 = vpow.pop %v1365
    %v1367 = vmul.f32 %v1102, 1.442695
    %v1368 = vpow.pop %v1367
    %v1369 = vmul.f32 %v1104, 1.442695
    %v1370 = vpow.pop %v1369
    %v1371 = vmul.f32 %v1263, 1.442695
    %v1372 = vpow.pop %v1371
    %v1373 = vmul.f32 %v1265, 1.442695
    %v1374 = vpow.pop %v1373
    %v1375 = vmul.f32 %v1108, 1.442695
    %v1376 = vpow.pop %v1375
    %v1377 = vmul.f32 %v1110, 1.442695
    %v1378 = vpow.pop %v1377
    %v1379 = vmul.f32 %v1269, 1.442695
    %v1380 = vpow.pop %v1379
    %v1381 = vmul.f32 %v1271, 1.442695
    %v1382 = vpow.pop %v1381
    %v1383 = vmul.f32 %v1114, 1.442695
    %v1384 = vpow.pop %v1383
    %v1385 = vmul.f32 %v1116, 1.442695
    %v1386 = vpow.pop %v1385
    %v1387 = vmul.f32 %v1275, 1.442695
    %v1388 = vpow.pop %v1387
    %v1389 = vmul.f32 %v1277, 1.442695
    %v1390 = vpow.pop %v1389
    %v1391 = vmul.f32 %v1120, 1.442695
    %v1392 = vpow.pop %v1391
    %v1393 = vmul.f32 %v1122, 1.442695
    %v1394 = vpow.pop %v1393
    %v1395 = vmul.f32 %v1281, 1.442695
    %v1396 = vpow.pop %v1395
    %v1397 = vmul.f32 %v1283, 1.442695
    %v1398 = vpow.pop %v1397
    %v1399 = vmul.f32 %v1126, 1.442695
    %v1400 = vpow.pop %v1399
    %v1401 = vmul.f32 %v1128, 1.442695
    %v1402 = vpow.pop %v1401
    %v1403 = vmul.f32 %v1287, 1.442695
    %v1404 = vpow.pop %v1403
    %v1405 = vmul.f32 %v1289, 1.442695
    %v1406 = vpow.pop %v1405
    %v1407 = vmul.f32 %v1132, 1.442695
    %v1408 = vpow.pop %v1407
    %v1409 = vmul.f32 %v1134, 1.442695
    %v1410 = vpow.pop %v1409
    %v1411 = vmul.f32 %v1293, 1.442695
    %v1412 = vpow.pop %v1411
    %v1413 = vmul.f32 %v1295, 1.442695
    %v1414 = vpow.pop %v1413
    %v1415 = vmul.f32 %v1138, 1.442695
    %v1416 = vpow.pop %v1415
    %v1417 = vmul.f32 %v1140, 1.442695
    %v1418 = vpow.pop %v1417
    %v1419 = vmul.f32 %v1299, 1.442695
    %v1420 = vpow.pop %v1419
    %v1421 = vmul.f32 %v1301, 1.442695
    %v1422 = vpow.pop %v1421
    %v1423 = vmul.f32 %v1144, 1.442695
    %v1424 = vpow.pop %v1423
    %v1425 = vmul.f32 %v1146, 1.442695
    %v1426 = vpow.pop %v1425
    %v1427 = vmul.f32 %v1305, 1.442695
    %v1428 = vpow.pop %v1427
    %v1429 = vmul.f32 %v1307, 1.442695
    %v1430 = vpow.pop %v1429
    %v1431 = vmul.f32 %v1150, 1.442695
    %v1432 = vpow.pop %v1431
    %v1433 = vmul.f32 %v1152, 1.442695
    %v1434 = vpow.pop %v1433
    %v1435 = vmul.f32 %v1311, 1.442695
    %v1436 = vpow.pop %v1435
    %v1437 = vmul.f32 %v1313, 1.442695
    %v1438 = vpow.pop %v1437
    %v1439 = vmul.f32 %v1156, 1.442695
    %v1440 = vpow.pop %v1439
    %v1441 = vmul.f32 %v1158, 1.442695
    %v1442 = vpow.pop %v1441
    %v1443 = vmul.f32 %v1317, 1.442695
    %v1444 = vpow.pop %v1443
    %v1445 = vmul.f32 %v1319, 1.442695
    %v1446 = vpow.pop %v1445
    %v1447 = vmul.f32 %v1162, 1.442695
    %v1448 = vpow.pop %v1447
    %v1449 = vmul.f32 %v1164, 1.442695
    %v1450 = vpow.pop %v1449
    %v1451 = vmul.f32 %v1323, 1.442695
    %v1452 = vpow.pop %v1451
    %v1453 = vmul.f32 %v1325, 1.442695
    %v1454 = vpow.pop %v1453
    %v1455 = vcvt.f32.s32.to.zero.pseudo %v28
    %v1456 = vcvt.f32.s32.to.zero.pseudo %v29
    %v1457 = vcvt.f32.s32.to.zero.pseudo %v30
    %v1458 = vcvt.f32.s32.to.zero.pseudo %v31
    %v1459 = vcvt.f32.s32.to.zero.pseudo %v32
    %v1460 = vcvt.f32.s32.to.zero.pseudo %v33
    %v1461 = vcvt.f32.s32.to.zero.pseudo %v34
    %v1462 = vcvt.f32.s32.to.zero.pseudo %v35
    %v1463 = vcvt.f32.s32.to.zero.pseudo %v36
    %v1464 = vcvt.f32.s32.to.zero.pseudo %v37
    %v1465 = vcvt.f32.s32.to.zero.pseudo %v38
    %v1466 = vcvt.f32.s32.to.zero.pseudo %v39
    %v1467 = vcvt.f32.s32.to.zero.pseudo %v40
    %v1468 = vcvt.f32.s32.to.zero.pseudo %v41
    %v1469 = vcvt.f32.s32.to.zero.pseudo %v42
    %v1470 = vcvt.f32.s32.to.zero.pseudo %v43
    %v1471 = vlaneseq
    %v1472 = vand.u32 %v1471, 127
    %v1473 = vadd.s32 %v1472, 128
    %v1474 = vadd.s32 %v1472, 256
    %v1475 = vadd.s32 %v1472, 384
    %v1476 = vadd.s32 %v1455, 400
    %v1477 = vadd.s32 %v1456, 400
    %v1478 = vadd.s32 %v1457, 400
    %v1479 = vadd.s32 %v1458, 400
    %v1480 = vadd.s32 %v1459, 400
    %v1481 = vadd.s32 %v1460, 400
    %v1482 = vadd.s32 %v1461, 400
    %v1483 = vadd.s32 %v1462, 400
    %v1484 = vadd.s32 %v1463, 400
    %v1485 = vadd.s32 %v1464, 400
    %v1486 = vadd.s32 %v1465, 400
    %v1487 = vadd.s32 %v1466, 400
    %v1488 = vadd.s32 %v1467, 400
    %v1489 = vadd.s32 %v1468, 400
    %v1490 = vadd.s32 %v1469, 400
    %v1491 = vadd.s32 %v1470, 400
    %1492 = vset.pattern.permute.xlu0 31
    %1493 = vperm.xlu0 %1492, %v1476
    %v1494 = vpop.permute.xlu0 %1493
    %1495 = vset.pattern.permute.xlu0 31
    %1496 = vperm.xlu0 %1495, %v1477
    %v1497 = vpop.permute.xlu0 %1496
    %1498 = vset.pattern.permute.xlu0 31
    %1499 = vperm.xlu0 %1498, %v1478
    %v1500 = vpop.permute.xlu0 %1499
    %1501 = vset.pattern.permute.xlu0 31
    %1502 = vperm.xlu0 %1501, %v1479
    %v1503 = vpop.permute.xlu0 %1502
    %1504 = vset.pattern.permute.xlu0 31
    %1505 = vperm.xlu0 %1504, %v1480
    %v1506 = vpop.permute.xlu0 %1505
    %1507 = vset.pattern.permute.xlu0 31
    %1508 = vperm.xlu0 %1507, %v1481
    %v1509 = vpop.permute.xlu0 %1508
    %1510 = vset.pattern.permute.xlu0 31
    %1511 = vperm.xlu0 %1510, %v1482
    %v1512 = vpop.permute.xlu0 %1511
    %1513 = vset.pattern.permute.xlu0 31
    %1514 = vperm.xlu0 %1513, %v1483
    %v1515 = vpop.permute.xlu0 %1514
    %1516 = vset.pattern.permute.xlu0 31
    %1517 = vperm.xlu0 %1516, %v1484
    %v1518 = vpop.permute.xlu0 %1517
    %1519 = vset.pattern.permute.xlu0 31
    %1520 = vperm.xlu0 %1519, %v1485
    %v1521 = vpop.permute.xlu0 %1520
    %1522 = vset.pattern.permute.xlu0 31
    %1523 = vperm.xlu0 %1522, %v1486
    %v1524 = vpop.permute.xlu0 %1523
    %1525 = vset.pattern.permute.xlu0 31
    %1526 = vperm.xlu0 %1525, %v1487
    %v1527 = vpop.permute.xlu0 %1526
    %1528 = vset.pattern.permute.xlu0 31
    %1529 = vperm.xlu0 %1528, %v1488
    %v1530 = vpop.permute.xlu0 %1529
    %1531 = vset.pattern.permute.xlu0 31
    %1532 = vperm.xlu0 %1531, %v1489
    %v1533 = vpop.permute.xlu0 %1532
    %1534 = vset.pattern.permute.xlu0 31
    %1535 = vperm.xlu0 %1534, %v1490
    %v1536 = vpop.permute.xlu0 %1535
    %1537 = vset.pattern.permute.xlu0 31
    %1538 = vperm.xlu0 %1537, %v1491
    %v1539 = vpop.permute.xlu0 %1538
    %vm1540 = vcmp.eq.s32.totalorder %v1472, %v1494
    %vm1541 = vcmp.eq.s32.totalorder %v1473, %v1494
    %vm1542 = vcmp.eq.s32.totalorder %v1474, %v1494
    %vm1543 = vcmp.eq.s32.totalorder %v1475, %v1494
    %vm1544 = vcmp.eq.s32.totalorder %v1472, %v1497
    %vm1545 = vcmp.eq.s32.totalorder %v1473, %v1497
    %vm1546 = vcmp.eq.s32.totalorder %v1474, %v1497
    %vm1547 = vcmp.eq.s32.totalorder %v1475, %v1497
    %vm1548 = vcmp.eq.s32.totalorder %v1472, %v1500
    %vm1549 = vcmp.eq.s32.totalorder %v1473, %v1500
    %vm1550 = vcmp.eq.s32.totalorder %v1474, %v1500
    %vm1551 = vcmp.eq.s32.totalorder %v1475, %v1500
    %vm1552 = vcmp.eq.s32.totalorder %v1472, %v1503
    %vm1553 = vcmp.eq.s32.totalorder %v1473, %v1503
    %vm1554 = vcmp.eq.s32.totalorder %v1474, %v1503
    %vm1555 = vcmp.eq.s32.totalorder %v1475, %v1503
    %vm1556 = vcmp.eq.s32.totalorder %v1472, %v1506
    %vm1557 = vcmp.eq.s32.totalorder %v1473, %v1506
    %vm1558 = vcmp.eq.s32.totalorder %v1474, %v1506
    %vm1559 = vcmp.eq.s32.totalorder %v1475, %v1506
    %vm1560 = vcmp.eq.s32.totalorder %v1472, %v1509
    %vm1561 = vcmp.eq.s32.totalorder %v1473, %v1509
    %vm1562 = vcmp.eq.s32.totalorder %v1474, %v1509
    %vm1563 = vcmp.eq.s32.totalorder %v1475, %v1509
    %vm1564 = vcmp.eq.s32.totalorder %v1472, %v1512
    %vm1565 = vcmp.eq.s32.totalorder %v1473, %v1512
    %vm1566 = vcmp.eq.s32.totalorder %v1474, %v1512
    %vm1567 = vcmp.eq.s32.totalorder %v1475, %v1512
    %vm1568 = vcmp.eq.s32.totalorder %v1472, %v1515
    %vm1569 = vcmp.eq.s32.totalorder %v1473, %v1515
    %vm1570 = vcmp.eq.s32.totalorder %v1474, %v1515
    %vm1571 = vcmp.eq.s32.totalorder %v1475, %v1515
    %vm1572 = vcmp.eq.s32.totalorder %v1472, %v1518
    %vm1573 = vcmp.eq.s32.totalorder %v1473, %v1518
    %vm1574 = vcmp.eq.s32.totalorder %v1474, %v1518
    %vm1575 = vcmp.eq.s32.totalorder %v1475, %v1518
    %vm1576 = vcmp.eq.s32.totalorder %v1472, %v1521
    %vm1577 = vcmp.eq.s32.totalorder %v1473, %v1521
    %vm1578 = vcmp.eq.s32.totalorder %v1474, %v1521
    %vm1579 = vcmp.eq.s32.totalorder %v1475, %v1521
    %vm1580 = vcmp.eq.s32.totalorder %v1472, %v1524
    %vm1581 = vcmp.eq.s32.totalorder %v1473, %v1524
    %vm1582 = vcmp.eq.s32.totalorder %v1474, %v1524
    %vm1583 = vcmp.eq.s32.totalorder %v1475, %v1524
    %vm1584 = vcmp.eq.s32.totalorder %v1472, %v1527
    %vm1585 = vcmp.eq.s32.totalorder %v1473, %v1527
    %vm1586 = vcmp.eq.s32.totalorder %v1474, %v1527
    %vm1587 = vcmp.eq.s32.totalorder %v1475, %v1527
    %vm1588 = vcmp.eq.s32.totalorder %v1472, %v1530
    %vm1589 = vcmp.eq.s32.totalorder %v1473, %v1530
    %vm1590 = vcmp.eq.s32.totalorder %v1474, %v1530
    %vm1591 = vcmp.eq.s32.totalorder %v1475, %v1530
    %vm1592 = vcmp.eq.s32.totalorder %v1472, %v1533
    %vm1593 = vcmp.eq.s32.totalorder %v1473, %v1533
    %vm1594 = vcmp.eq.s32.totalorder %v1474, %v1533
    %vm1595 = vcmp.eq.s32.totalorder %v1475, %v1533
    %vm1596 = vcmp.eq.s32.totalorder %v1472, %v1536
    %vm1597 = vcmp.eq.s32.totalorder %v1473, %v1536
    %vm1598 = vcmp.eq.s32.totalorder %v1474, %v1536
    %vm1599 = vcmp.eq.s32.totalorder %v1475, %v1536
    %vm1600 = vcmp.eq.s32.totalorder %v1472, %v1539
    %vm1601 = vcmp.eq.s32.totalorder %v1473, %v1539
    %vm1602 = vcmp.eq.s32.totalorder %v1474, %v1539
    %vm1603 = vcmp.eq.s32.totalorder %v1475, %v1539
    %v1604 = vsel %vm1540, 1.0, %v1328
    %v1605 = vsel %vm1541, 1.0, %v1330
    %v1606 = vsel %vm1542, 1.0, %v1332
    %v1607 = vsel %vm1543, 1.0, %v1334
    %v1608 = vsel %vm1544, 1.0, %v1336
    %v1609 = vsel %vm1545, 1.0, %v1338
    %v1610 = vsel %vm1546, 1.0, %v1340
    %v1611 = vsel %vm1547, 1.0, %v1342
    %v1612 = vsel %vm1548, 1.0, %v1344
    %v1613 = vsel %vm1549, 1.0, %v1346
    %v1614 = vsel %vm1550, 1.0, %v1348
    %v1615 = vsel %vm1551, 1.0, %v1350
    %v1616 = vsel %vm1552, 1.0, %v1352
    %v1617 = vsel %vm1553, 1.0, %v1354
    %v1618 = vsel %vm1554, 1.0, %v1356
    %v1619 = vsel %vm1555, 1.0, %v1358
    %v1620 = vsel %vm1556, 1.0, %v1360
    %v1621 = vsel %vm1557, 1.0, %v1362
    %v1622 = vsel %vm1558, 1.0, %v1364
    %v1623 = vsel %vm1559, 1.0, %v1366
    %v1624 = vsel %vm1560, 1.0, %v1368
    %v1625 = vsel %vm1561, 1.0, %v1370
    %v1626 = vsel %vm1562, 1.0, %v1372
    %v1627 = vsel %vm1563, 1.0, %v1374
    %v1628 = vsel %vm1564, 1.0, %v1376
    %v1629 = vsel %vm1565, 1.0, %v1378
    %v1630 = vsel %vm1566, 1.0, %v1380
    %v1631 = vsel %vm1567, 1.0, %v1382
    %v1632 = vsel %vm1568, 1.0, %v1384
    %v1633 = vsel %vm1569, 1.0, %v1386
    %v1634 = vsel %vm1570, 1.0, %v1388
    %v1635 = vsel %vm1571, 1.0, %v1390
    %v1636 = vsel %vm1572, 1.0, %v1392
    %v1637 = vsel %vm1573, 1.0, %v1394
    %v1638 = vsel %vm1574, 1.0, %v1396
    %v1639 = vsel %vm1575, 1.0, %v1398
    %v1640 = vsel %vm1576, 1.0, %v1400
    %v1641 = vsel %vm1577, 1.0, %v1402
    %v1642 = vsel %vm1578, 1.0, %v1404
    %v1643 = vsel %vm1579, 1.0, %v1406
    %v1644 = vsel %vm1580, 1.0, %v1408
    %v1645 = vsel %vm1581, 1.0, %v1410
    %v1646 = vsel %vm1582, 1.0, %v1412
    %v1647 = vsel %vm1583, 1.0, %v1414
    %v1648 = vsel %vm1584, 1.0, %v1416
    %v1649 = vsel %vm1585, 1.0, %v1418
    %v1650 = vsel %vm1586, 1.0, %v1420
    %v1651 = vsel %vm1587, 1.0, %v1422
    %v1652 = vsel %vm1588, 1.0, %v1424
    %v1653 = vsel %vm1589, 1.0, %v1426
    %v1654 = vsel %vm1590, 1.0, %v1428
    %v1655 = vsel %vm1591, 1.0, %v1430
    %v1656 = vsel %vm1592, 1.0, %v1432
    %v1657 = vsel %vm1593, 1.0, %v1434
    %v1658 = vsel %vm1594, 1.0, %v1436
    %v1659 = vsel %vm1595, 1.0, %v1438
    %v1660 = vsel %vm1596, 1.0, %v1440
    %v1661 = vsel %vm1597, 1.0, %v1442
    %v1662 = vsel %vm1598, 1.0, %v1444
    %v1663 = vsel %vm1599, 1.0, %v1446
    %v1664 = vsel %vm1600, 1.0, %v1448
    %v1665 = vsel %vm1601, 1.0, %v1450
    %v1666 = vsel %vm1602, 1.0, %v1452
    %v1667 = vsel %vm1603, 1.0, %v1454
    %v1668 = vpack.c.bf16 %v1608, %v1604
    %v1669 = vpack.c.bf16 %v1609, %v1605
    %v1670 = vpack.c.bf16 %v1610, %v1606
    %v1671 = vpack.c.bf16 %v1611, %v1607
    %v1672 = vpack.c.bf16 %v1616, %v1612
    %v1673 = vpack.c.bf16 %v1617, %v1613
    %v1674 = vpack.c.bf16 %v1618, %v1614
    %v1675 = vpack.c.bf16 %v1619, %v1615
    %v1676 = vpack.c.bf16 %v1624, %v1620
    %v1677 = vpack.c.bf16 %v1625, %v1621
    %v1678 = vpack.c.bf16 %v1626, %v1622
    %v1679 = vpack.c.bf16 %v1627, %v1623
    %v1680 = vpack.c.bf16 %v1632, %v1628
    %v1681 = vpack.c.bf16 %v1633, %v1629
    %v1682 = vpack.c.bf16 %v1634, %v1630
    %v1683 = vpack.c.bf16 %v1635, %v1631
    %v1684 = vpack.c.bf16 %v1640, %v1636
    %v1685 = vpack.c.bf16 %v1641, %v1637
    %v1686 = vpack.c.bf16 %v1642, %v1638
    %v1687 = vpack.c.bf16 %v1643, %v1639
    %v1688 = vpack.c.bf16 %v1648, %v1644
    %v1689 = vpack.c.bf16 %v1649, %v1645
    %v1690 = vpack.c.bf16 %v1650, %v1646
    %v1691 = vpack.c.bf16 %v1651, %v1647
    %v1692 = vpack.c.bf16 %v1656, %v1652
    %v1693 = vpack.c.bf16 %v1657, %v1653
    %v1694 = vpack.c.bf16 %v1658, %v1654
    %v1695 = vpack.c.bf16 %v1659, %v1655
    %v1696 = vpack.c.bf16 %v1664, %v1660
    %v1697 = vpack.c.bf16 %v1665, %v1661
    %v1698 = vpack.c.bf16 %v1666, %v1662
    %v1699 = vpack.c.bf16 %v1667, %v1663
    %v1700 = vld [vmem:[%s3] sm:$0xf]
    %v1701 = vld [vmem:[%s3 + $0x4] sm:$0xf]
    %v1702 = vld [vmem:[%s3 + $0x8] sm:$0xf]
    %v1703 = vld [vmem:[%s3 + $0xc] sm:$0xf]
    %v1704 = vld [vmem:[%s3 + $0x10] sm:$0xf]
    %v1705 = vld [vmem:[%s3 + $0x14] sm:$0xf]
    %v1706 = vld [vmem:[%s3 + $0x18] sm:$0xf]
    %v1707 = vld [vmem:[%s3 + $0x1c] sm:$0xf]
    %v1708 = vld [vmem:[%s3 + $0x20] sm:$0xf]
    %v1709 = vld [vmem:[%s3 + $0x24] sm:$0xf]
    %v1710 = vld [vmem:[%s3 + $0x28] sm:$0xf]
    %v1711 = vld [vmem:[%s3 + $0x2c] sm:$0xf]
    %v1712 = vld [vmem:[%s3 + $0x30] sm:$0xf]
    %v1713 = vld [vmem:[%s3 + $0x34] sm:$0xf]
    %v1714 = vld [vmem:[%s3 + $0x38] sm:$0xf]
    %v1715 = vld [vmem:[%s3 + $0x3c] sm:$0xf]
    %v1716 = vld [vmem:[%s3 + $0x40] sm:$0xf]
    %v1717 = vld [vmem:[%s3 + $0x44] sm:$0xf]
    %v1718 = vld [vmem:[%s3 + $0x48] sm:$0xf]
    %v1719 = vld [vmem:[%s3 + $0x4c] sm:$0xf]
    %v1720 = vld [vmem:[%s3 + $0x50] sm:$0xf]
    %v1721 = vld [vmem:[%s3 + $0x54] sm:$0xf]
    %v1722 = vld [vmem:[%s3 + $0x58] sm:$0xf]
    %v1723 = vld [vmem:[%s3 + $0x5c] sm:$0xf]
    %v1724 = vld [vmem:[%s3 + $0x60] sm:$0xf]
    %v1725 = vld [vmem:[%s3 + $0x64] sm:$0xf]
    %v1726 = vld [vmem:[%s3 + $0x68] sm:$0xf]
    %v1727 = vld [vmem:[%s3 + $0x6c] sm:$0xf]
    %v1728 = vld [vmem:[%s3 + $0x70] sm:$0xf]
    %v1729 = vld [vmem:[%s3 + $0x74] sm:$0xf]
    %v1730 = vld [vmem:[%s3 + $0x78] sm:$0xf]
    %v1731 = vld [vmem:[%s3 + $0x7c] sm:$0xf]
    %v1732 = vld [vmem:[%s3 + $0x80] sm:$0xf]
    %v1733 = vld [vmem:[%s3 + $0x84] sm:$0xf]
    %v1734 = vld [vmem:[%s3 + $0x88] sm:$0xf]
    %v1735 = vld [vmem:[%s3 + $0x8c] sm:$0xf]
    %v1736 = vld [vmem:[%s3 + $0x90] sm:$0xf]
    %v1737 = vld [vmem:[%s3 + $0x94] sm:$0xf]
    %v1738 = vld [vmem:[%s3 + $0x98] sm:$0xf]
    %v1739 = vld [vmem:[%s3 + $0x9c] sm:$0xf]
    %v1740 = vld [vmem:[%s3 + $0xa0] sm:$0xf]
    %v1741 = vld [vmem:[%s3 + $0xa4] sm:$0xf]
    %v1742 = vld [vmem:[%s3 + $0xa8] sm:$0xf]
    %v1743 = vld [vmem:[%s3 + $0xac] sm:$0xf]
    %v1744 = vld [vmem:[%s3 + $0xb0] sm:$0xf]
    %v1745 = vld [vmem:[%s3 + $0xb4] sm:$0xf]
    %v1746 = vld [vmem:[%s3 + $0xb8] sm:$0xf]
    %v1747 = vld [vmem:[%s3 + $0xbc] sm:$0xf]
    %v1748 = vld [vmem:[%s3 + $0xc0] sm:$0xf]
    %v1749 = vld [vmem:[%s3 + $0xc4] sm:$0xf]
    %v1750 = vld [vmem:[%s3 + $0xc8] sm:$0xf]
    %v1751 = vld [vmem:[%s3 + $0xcc] sm:$0xf]
    %v1752 = vld [vmem:[%s3 + $0xd0] sm:$0xf]
    %v1753 = vld [vmem:[%s3 + $0xd4] sm:$0xf]
    %v1754 = vld [vmem:[%s3 + $0xd8] sm:$0xf]
    %v1755 = vld [vmem:[%s3 + $0xdc] sm:$0xf]
    %v1756 = vld [vmem:[%s3 + $0xe0] sm:$0xf]
    %v1757 = vld [vmem:[%s3 + $0xe4] sm:$0xf]
    %v1758 = vld [vmem:[%s3 + $0xe8] sm:$0xf]
    %v1759 = vld [vmem:[%s3 + $0xec] sm:$0xf]
    %v1760 = vld [vmem:[%s3 + $0xf0] sm:$0xf]
    %v1761 = vld [vmem:[%s3 + $0xf4] sm:$0xf]
    %v1762 = vld [vmem:[%s3 + $0xf8] sm:$0xf]
    %v1763 = vld [vmem:[%s3 + $0xfc] sm:$0xf]
    %v1764 = vld [vmem:[%s4] sm:$0x1]
    %v1766 = vlaneseq
    %v1767 = vshrl.u32 %v1766, 7
    %v1768 = vsub.s32 0, %v1767
    %v1769 = vrot.slane %v1764, %v1768
    %v1835 = vunpack.c.l.b16 %v1700
    %v1836 = vunpack.c.l.b16 %v1701
    %v1837 = vunpack.c.l.b16 %v1702
    %v1838 = vunpack.c.l.b16 %v1703
    %v1839 = vunpack.c.l.b16 %v1704
    %v1840 = vunpack.c.l.b16 %v1705
    %v1841 = vunpack.c.l.b16 %v1706
    %v1842 = vunpack.c.l.b16 %v1707
    %v1843 = vunpack.c.l.b16 %v1708
    %v1844 = vunpack.c.l.b16 %v1709
    %v1845 = vunpack.c.l.b16 %v1710
    %v1846 = vunpack.c.l.b16 %v1711
    %v1847 = vunpack.c.l.b16 %v1712
    %v1848 = vunpack.c.l.b16 %v1713
    %v1849 = vunpack.c.l.b16 %v1714
    %v1850 = vunpack.c.l.b16 %v1715
    %v1851 = vunpack.c.l.b16 %v1716
    %v1852 = vunpack.c.l.b16 %v1717
    %v1853 = vunpack.c.l.b16 %v1718
    %v1854 = vunpack.c.l.b16 %v1719
    %v1855 = vunpack.c.l.b16 %v1720
    %v1856 = vunpack.c.l.b16 %v1721
    %v1857 = vunpack.c.l.b16 %v1722
    %v1858 = vunpack.c.l.b16 %v1723
    %v1859 = vunpack.c.l.b16 %v1724
    %v1860 = vunpack.c.l.b16 %v1725
    %v1861 = vunpack.c.l.b16 %v1726
    %v1862 = vunpack.c.l.b16 %v1727
    %v1863 = vunpack.c.l.b16 %v1728
    %v1864 = vunpack.c.l.b16 %v1729
    %v1865 = vunpack.c.l.b16 %v1730
    %v1866 = vunpack.c.l.b16 %v1731
    %v1867 = vunpack.c.l.b16 %v1732
    %v1868 = vunpack.c.l.b16 %v1733
    %v1869 = vunpack.c.l.b16 %v1734
    %v1870 = vunpack.c.l.b16 %v1735
    %v1871 = vunpack.c.l.b16 %v1736
    %v1872 = vunpack.c.l.b16 %v1737
    %v1873 = vunpack.c.l.b16 %v1738
    %v1874 = vunpack.c.l.b16 %v1739
    %v1875 = vunpack.c.l.b16 %v1740
    %v1876 = vunpack.c.l.b16 %v1741
    %v1877 = vunpack.c.l.b16 %v1742
    %v1878 = vunpack.c.l.b16 %v1743
    %v1879 = vunpack.c.l.b16 %v1744
    %v1880 = vunpack.c.l.b16 %v1745
    %v1881 = vunpack.c.l.b16 %v1746
    %v1882 = vunpack.c.l.b16 %v1747
    %v1883 = vunpack.c.l.b16 %v1748
    %v1884 = vunpack.c.l.b16 %v1749
    %v1885 = vunpack.c.l.b16 %v1750
    %v1886 = vunpack.c.l.b16 %v1751
    %v1887 = vunpack.c.l.b16 %v1752
    %v1888 = vunpack.c.l.b16 %v1753
    %v1889 = vunpack.c.l.b16 %v1754
    %v1890 = vunpack.c.l.b16 %v1755
    %v1891 = vunpack.c.l.b16 %v1756
    %v1892 = vunpack.c.l.b16 %v1757
    %v1893 = vunpack.c.l.b16 %v1758
    %v1894 = vunpack.c.l.b16 %v1759
    %v1895 = vunpack.c.l.b16 %v1760
    %v1896 = vunpack.c.l.b16 %v1761
    %v1897 = vunpack.c.l.b16 %v1762
    %v1898 = vunpack.c.l.b16 %v1763
    %v1899 = vpack.c.b16 %v1836, %v1835
    %v1900 = vpack.c.b16 %v1838, %v1837
    %v1901 = vpack.c.b16 %v1840, %v1839
    %v1902 = vpack.c.b16 %v1842, %v1841
    %v1903 = vpack.c.b16 %v1844, %v1843
    %v1904 = vpack.c.b16 %v1846, %v1845
    %v1905 = vpack.c.b16 %v1848, %v1847
    %v1906 = vpack.c.b16 %v1850, %v1849
    %v1907 = vpack.c.b16 %v1852, %v1851
    %v1908 = vpack.c.b16 %v1854, %v1853
    %v1909 = vpack.c.b16 %v1856, %v1855
    %v1910 = vpack.c.b16 %v1858, %v1857
    %v1911 = vpack.c.b16 %v1860, %v1859
    %v1912 = vpack.c.b16 %v1862, %v1861
    %v1913 = vpack.c.b16 %v1864, %v1863
    %v1914 = vpack.c.b16 %v1866, %v1865
    %v1915 = vpack.c.b16 %v1868, %v1867
    %v1916 = vpack.c.b16 %v1870, %v1869
    %v1917 = vpack.c.b16 %v1872, %v1871
    %v1918 = vpack.c.b16 %v1874, %v1873
    %v1919 = vpack.c.b16 %v1876, %v1875
    %v1920 = vpack.c.b16 %v1878, %v1877
    %v1921 = vpack.c.b16 %v1880, %v1879
    %v1922 = vpack.c.b16 %v1882, %v1881
    %v1923 = vpack.c.b16 %v1884, %v1883
    %v1924 = vpack.c.b16 %v1886, %v1885
    %v1925 = vpack.c.b16 %v1888, %v1887
    %v1926 = vpack.c.b16 %v1890, %v1889
    %v1927 = vpack.c.b16 %v1892, %v1891
    %v1928 = vpack.c.b16 %v1894, %v1893
    %v1929 = vpack.c.b16 %v1896, %v1895
    %v1930 = vpack.c.b16 %v1898, %v1897
    %1963 = vmatprep.subr.bf16.mxu0 0
    %1964 = vmatpush1.bf16.msra.mxu0 %v1899
    %1965 = vmatprep.subr.bf16.mxu0 0
    %1966 = vmatpush1.bf16.msra.mxu0 %v1900
    %1967 = vmatprep.subr.bf16.mxu0 0
    %1968 = vmatpush1.bf16.msra.mxu0 %v1901
    %1969 = vmatprep.subr.bf16.mxu0 0
    %1970 = vmatpush1.bf16.msra.mxu0 %v1902
    %1971 = vmatprep.subr.bf16.mxu0 0
    %1972 = vmatpush1.bf16.msra.mxu0 %v1903
    %1973 = vmatprep.subr.bf16.mxu0 0
    %1974 = vmatpush1.bf16.msra.mxu0 %v1904
    %1975 = vmatprep.subr.bf16.mxu0 0
    %1976 = vmatpush1.bf16.msra.mxu0 %v1905
    %1977 = vmatprep.subr.bf16.mxu0 0
    %1978 = vmatpush1.bf16.msra.mxu0 %v1906
    %1979 = vmatprep.subr.bf16.mxu0 0
    %1980 = vmatpush1.bf16.msra.mxu0 %v1907
    %1981 = vmatprep.subr.bf16.mxu0 0
    %1982 = vmatpush1.bf16.msra.mxu0 %v1908
    %1983 = vmatprep.subr.bf16.mxu0 0
    %1984 = vmatpush1.bf16.msra.mxu0 %v1909
    %1985 = vmatprep.subr.bf16.mxu0 0
    %1986 = vmatpush1.bf16.msra.mxu0 %v1910
    %1987 = vmatprep.subr.bf16.mxu0 0
    %1988 = vmatpush1.bf16.msra.mxu0 %v1911
    %1989 = vmatprep.subr.bf16.mxu0 0
    %1990 = vmatpush1.bf16.msra.mxu0 %v1912
    %1991 = vmatprep.subr.bf16.mxu0 0
    %1992 = vmatpush1.bf16.msra.mxu0 %v1913
    %1993 = vmatprep.subr.bf16.mxu0 0
    %1994 = vmatpush1.bf16.msra.mxu0 %v1914
    %1995 = vmatprep.mubr.bf16.mxu0 %v1669
    %1996 = vmatmul.mubr.bf16.gmra.mrb[0].mxu0 %v1668
    %v1997 = vpop.f32.mrb[0].mxu0
    %v1998 = vadd.f32 %v1769, %v1997
    %v1999 = vpop.f32.mrb[0].mxu0
    %v2000 = vpop.f32.mrb[0].mxu0
    %v2001 = vadd.f32 %v1769, %v2000
    %v2002 = vpop.f32.mrb[0].mxu0
    %2003 = vmatprep.mubr.bf16.mxu0 %v1673
    %2004 = vmatmul.mubr.bf16.gmra.mrb[0].mxu0 %v1672
    %v2005 = vpop.f32.mrb[0].mxu0
    %v2006 = vadd.f32 %v1769, %v2005
    %v2007 = vpop.f32.mrb[0].mxu0
    %v2008 = vpop.f32.mrb[0].mxu0
    %v2009 = vadd.f32 %v1769, %v2008
    %v2010 = vpop.f32.mrb[0].mxu0
    %2011 = vmatprep.mubr.bf16.mxu0 %v1677
    %2012 = vmatmul.mubr.bf16.gmra.mrb[0].mxu0 %v1676
    %v2013 = vpop.f32.mrb[0].mxu0
    %v2014 = vadd.f32 %v1769, %v2013
    %v2015 = vpop.f32.mrb[0].mxu0
    %v2016 = vpop.f32.mrb[0].mxu0
    %v2017 = vadd.f32 %v1769, %v2016
    %v2018 = vpop.f32.mrb[0].mxu0
    %2019 = vmatprep.mubr.bf16.mxu0 %v1681
    %2020 = vmatmul.mubr.bf16.gmra.mrb[0].mxu0 %v1680
    %v2021 = vpop.f32.mrb[0].mxu0
    %v2022 = vadd.f32 %v1769, %v2021
    %v2023 = vpop.f32.mrb[0].mxu0
    %v2024 = vpop.f32.mrb[0].mxu0
    %v2025 = vadd.f32 %v1769, %v2024
    %v2026 = vpop.f32.mrb[0].mxu0
    %2027 = vmatprep.mubr.bf16.mxu0 %v1685
    %2028 = vmatmul.mubr.bf16.gmra.mrb[0].mxu0 %v1684
    %v2029 = vpop.f32.mrb[0].mxu0
    %v2030 = vadd.f32 %v1769, %v2029
    %v2031 = vpop.f32.mrb[0].mxu0
    %v2032 = vpop.f32.mrb[0].mxu0
    %v2033 = vadd.f32 %v1769, %v2032
    %v2034 = vpop.f32.mrb[0].mxu0
    %2035 = vmatprep.mubr.bf16.mxu0 %v1689
    %2036 = vmatmul.mubr.bf16.gmra.mrb[0].mxu0 %v1688
    %v2037 = vpop.f32.mrb[0].mxu0
    %v2038 = vadd.f32 %v1769, %v2037
    %v2039 = vpop.f32.mrb[0].mxu0
    %v2040 = vpop.f32.mrb[0].mxu0
    %v2041 = vadd.f32 %v1769, %v2040
    %v2042 = vpop.f32.mrb[0].mxu0
    %2043 = vmatprep.mubr.bf16.mxu0 %v1693
    %2044 = vmatmul.mubr.bf16.gmra.mrb[0].mxu0 %v1692
    %v2045 = vpop.f32.mrb[0].mxu0
    %v2046 = vadd.f32 %v1769, %v2045
    %v2047 = vpop.f32.mrb[0].mxu0
    %v2048 = vpop.f32.mrb[0].mxu0
    %v2049 = vadd.f32 %v1769, %v2048
    %v2050 = vpop.f32.mrb[0].mxu0
    %2051 = vmatprep.mubr.bf16.mxu0 %v1697
    %2052 = vmatmul.mubr.bf16.gmra.mrb[0].mxu0 %v1696
    %v2053 = vpop.f32.mrb[0].mxu0
    %v2054 = vadd.f32 %v1769, %v2053
    %v2055 = vpop.f32.mrb[0].mxu0
    %v2056 = vpop.f32.mrb[0].mxu0
    %v2057 = vadd.f32 %v1769, %v2056
    %v2058 = vpop.f32.mrb[0].mxu0
    %2059 = vdwg.mxu0
    %2060 = vmatprep.subr.bf16.mxu0 0
    %2061 = vmatpush1.bf16.msra.mxu0 %v1915
    %2062 = vmatprep.subr.bf16.mxu0 0
    %2063 = vmatpush1.bf16.msra.mxu0 %v1916
    %2064 = vmatprep.subr.bf16.mxu0 0
    %2065 = vmatpush1.bf16.msra.mxu0 %v1917
    %2066 = vmatprep.subr.bf16.mxu0 0
    %2067 = vmatpush1.bf16.msra.mxu0 %v1918
    %2068 = vmatprep.subr.bf16.mxu0 0
    %2069 = vmatpush1.bf16.msra.mxu0 %v1919
    %2070 = vmatprep.subr.bf16.mxu0 0
    %2071 = vmatpush1.bf16.msra.mxu0 %v1920
    %2072 = vmatprep.subr.bf16.mxu0 0
    %2073 = vmatpush1.bf16.msra.mxu0 %v1921
    %2074 = vmatprep.subr.bf16.mxu0 0
    %2075 = vmatpush1.bf16.msra.mxu0 %v1922
    %2076 = vmatprep.subr.bf16.mxu0 0
    %2077 = vmatpush1.bf16.msra.mxu0 %v1923
    %2078 = vmatprep.subr.bf16.mxu0 0
    %2079 = vmatpush1.bf16.msra.mxu0 %v1924
    %2080 = vmatprep.subr.bf16.mxu0 0
    %2081 = vmatpush1.bf16.msra.mxu0 %v1925
    %2082 = vmatprep.subr.bf16.mxu0 0
    %2083 = vmatpush1.bf16.msra.mxu0 %v1926
    %2084 = vmatprep.subr.bf16.mxu0 0
    %2085 = vmatpush1.bf16.msra.mxu0 %v1927
    %2086 = vmatprep.subr.bf16.mxu0 0
    %2087 = vmatpush1.bf16.msra.mxu0 %v1928
    %2088 = vmatprep.subr.bf16.mxu0 0
    %2089 = vmatpush1.bf16.msra.mxu0 %v1929
    %2090 = vmatprep.subr.bf16.mxu0 0
    %2091 = vmatpush1.bf16.msra.mxu0 %v1930
    %2092 = vmatprep.mubr.bf16.mxu0 %v1671
    %2093 = vmatmul.mubr.bf16.gmra.mrb[0].mxu0 %v1670
    %v2094 = vpop.f32.mrb[0].mxu0
    %v2095 = vadd.f32 %v1998, %v2094
    %v2096 = vpop.f32.mrb[0].mxu0
    %v2097 = vpop.f32.mrb[0].mxu0
    %v2098 = vadd.f32 %v2001, %v2097
    %v2099 = vpop.f32.mrb[0].mxu0
    %2100 = vmatprep.mubr.bf16.mxu0 %v1675
    %2101 = vmatmul.mubr.bf16.gmra.mrb[0].mxu0 %v1674
    %v2102 = vpop.f32.mrb[0].mxu0
    %v2103 = vadd.f32 %v2006, %v2102
    %v2104 = vpop.f32.mrb[0].mxu0
    %v2105 = vpop.f32.mrb[0].mxu0
    %v2106 = vadd.f32 %v2009, %v2105
    %v2107 = vpop.f32.mrb[0].mxu0
    %2108 = vmatprep.mubr.bf16.mxu0 %v1679
    %2109 = vmatmul.mubr.bf16.gmra.mrb[0].mxu0 %v1678
    %v2110 = vpop.f32.mrb[0].mxu0
    %v2111 = vadd.f32 %v2014, %v2110
    %v2112 = vpop.f32.mrb[0].mxu0
    %v2113 = vpop.f32.mrb[0].mxu0
    %v2114 = vadd.f32 %v2017, %v2113
    %v2115 = vpop.f32.mrb[0].mxu0
    %2116 = vmatprep.mubr.bf16.mxu0 %v1683
    %2117 = vmatmul.mubr.bf16.gmra.mrb[0].mxu0 %v1682
    %v2118 = vpop.f32.mrb[0].mxu0
    %v2119 = vadd.f32 %v2022, %v2118
    %v2120 = vpop.f32.mrb[0].mxu0
    %v2121 = vpop.f32.mrb[0].mxu0
    %v2122 = vadd.f32 %v2025, %v2121
    %v2123 = vpop.f32.mrb[0].mxu0
    %2124 = vmatprep.mubr.bf16.mxu0 %v1687
    %2125 = vmatmul.mubr.bf16.gmra.mrb[0].mxu0 %v1686
    %v2126 = vpop.f32.mrb[0].mxu0
    %v2127 = vadd.f32 %v2030, %v2126
    %v2128 = vpop.f32.mrb[0].mxu0
    %v2129 = vpop.f32.mrb[0].mxu0
    %v2130 = vadd.f32 %v2033, %v2129
    %v2131 = vpop.f32.mrb[0].mxu0
    %2132 = vmatprep.mubr.bf16.mxu0 %v1691
    %2133 = vmatmul.mubr.bf16.gmra.mrb[0].mxu0 %v1690
    %v2134 = vpop.f32.mrb[0].mxu0
    %v2135 = vadd.f32 %v2038, %v2134
    %v2136 = vpop.f32.mrb[0].mxu0
    %v2137 = vpop.f32.mrb[0].mxu0
    %v2138 = vadd.f32 %v2041, %v2137
    %v2139 = vpop.f32.mrb[0].mxu0
    %2140 = vmatprep.mubr.bf16.mxu0 %v1695
    %2141 = vmatmul.mubr.bf16.gmra.mrb[0].mxu0 %v1694
    %v2142 = vpop.f32.mrb[0].mxu0
    %v2143 = vadd.f32 %v2046, %v2142
    %v2144 = vpop.f32.mrb[0].mxu0
    %v2145 = vpop.f32.mrb[0].mxu0
    %v2146 = vadd.f32 %v2049, %v2145
    %v2147 = vpop.f32.mrb[0].mxu0
    %2148 = vmatprep.mubr.bf16.mxu0 %v1699
    %2149 = vmatmul.mubr.bf16.gmra.mrb[0].mxu0 %v1698
    %v2150 = vpop.f32.mrb[0].mxu0
    %v2151 = vadd.f32 %v2054, %v2150
    %v2152 = vpop.f32.mrb[0].mxu0
    %v2153 = vpop.f32.mrb[0].mxu0
    %v2154 = vadd.f32 %v2057, %v2153
    %v2155 = vpop.f32.mrb[0].mxu0
    %2156 = vdwg.mxu0
    %v2157 = vsel %vm108, %v2095, 0.0
    %2158 = vadd.xlane.f32.xlu0 %v2157
    %v2159 = vpop.xlane.xlu0 %2158
    %v2160 = vsel %vm108, %v2098, 0.0
    %2161 = vadd.xlane.f32.xlu0 %v2160
    %v2162 = vpop.xlane.xlu0 %2161
    %v2163 = vsel %vm108, %v2103, 0.0
    %2164 = vadd.xlane.f32.xlu0 %v2163
    %v2165 = vpop.xlane.xlu0 %2164
    %v2166 = vsel %vm108, %v2106, 0.0
    %2167 = vadd.xlane.f32.xlu0 %v2166
    %v2168 = vpop.xlane.xlu0 %2167
    %v2169 = vsel %vm108, %v2111, 0.0
    %2170 = vadd.xlane.f32.xlu0 %v2169
    %v2171 = vpop.xlane.xlu0 %2170
    %v2172 = vsel %vm108, %v2114, 0.0
    %2173 = vadd.xlane.f32.xlu0 %v2172
    %v2174 = vpop.xlane.xlu0 %2173
    %v2175 = vsel %vm108, %v2119, 0.0
    %2176 = vadd.xlane.f32.xlu0 %v2175
    %v2177 = vpop.xlane.xlu0 %2176
    %v2178 = vsel %vm108, %v2122, 0.0
    %2179 = vadd.xlane.f32.xlu0 %v2178
    %v2180 = vpop.xlane.xlu0 %2179
    %v2181 = vsel %vm108, %v2127, 0.0
    %2182 = vadd.xlane.f32.xlu0 %v2181
    %v2183 = vpop.xlane.xlu0 %2182
    %v2184 = vsel %vm108, %v2130, 0.0
    %2185 = vadd.xlane.f32.xlu0 %v2184
    %v2186 = vpop.xlane.xlu0 %2185
    %v2187 = vsel %vm108, %v2135, 0.0
    %2188 = vadd.xlane.f32.xlu0 %v2187
    %v2189 = vpop.xlane.xlu0 %2188
    %v2190 = vsel %vm108, %v2138, 0.0
    %2191 = vadd.xlane.f32.xlu0 %v2190
    %v2192 = vpop.xlane.xlu0 %2191
    %v2193 = vsel %vm108, %v2143, 0.0
    %2194 = vadd.xlane.f32.xlu0 %v2193
    %v2195 = vpop.xlane.xlu0 %2194
    %v2196 = vsel %vm108, %v2146, 0.0
    %2197 = vadd.xlane.f32.xlu0 %v2196
    %v2198 = vpop.xlane.xlu0 %2197
    %v2199 = vsel %vm108, %v2151, 0.0
    %2200 = vadd.xlane.f32.xlu0 %v2199
    %v2201 = vpop.xlane.xlu0 %2200
    %v2202 = vsel %vm108, %v2154, 0.0
    %2203 = vadd.xlane.f32.xlu0 %v2202
    %v2204 = vpop.xlane.xlu0 %2203
    %v2205 = vrcp.pop 32.0
    %v2206 = vmul.f32 %v2159, %v2205
    %v2207 = vmul.f32 %v2162, %v2205
    %v2208 = vmul.f32 %v2165, %v2205
    %v2209 = vmul.f32 %v2168, %v2205
    %v2210 = vmul.f32 %v2171, %v2205
    %v2211 = vmul.f32 %v2174, %v2205
    %v2212 = vmul.f32 %v2177, %v2205
    %v2213 = vmul.f32 %v2180, %v2205
    %v2214 = vmul.f32 %v2183, %v2205
    %v2215 = vmul.f32 %v2186, %v2205
    %v2216 = vmul.f32 %v2189, %v2205
    %v2217 = vmul.f32 %v2192, %v2205
    %v2218 = vmul.f32 %v2195, %v2205
    %v2219 = vmul.f32 %v2198, %v2205
    %v2220 = vmul.f32 %v2201, %v2205
    %v2221 = vmul.f32 %v2204, %v2205
    %v2222 = vsub.f32 %v2095, %v2206
    %v2223 = vsub.f32 %v2098, %v2207
    %v2224 = vsub.f32 %v2103, %v2208
    %v2225 = vsub.f32 %v2106, %v2209
    %v2226 = vsub.f32 %v2111, %v2210
    %v2227 = vsub.f32 %v2114, %v2211
    %v2228 = vsub.f32 %v2119, %v2212
    %v2229 = vsub.f32 %v2122, %v2213
    %v2230 = vsub.f32 %v2127, %v2214
    %v2231 = vsub.f32 %v2130, %v2215
    %v2232 = vsub.f32 %v2135, %v2216
    %v2233 = vsub.f32 %v2138, %v2217
    %v2234 = vsub.f32 %v2143, %v2218
    %v2235 = vsub.f32 %v2146, %v2219
    %v2236 = vsub.f32 %v2151, %v2220
    %v2237 = vsub.f32 %v2154, %v2221
    %v2238 = vmul.f32 %v2222, %v2222
    %v2239 = vmul.f32 %v2223, %v2223
    %v2240 = vmul.f32 %v2224, %v2224
    %v2241 = vmul.f32 %v2225, %v2225
    %v2242 = vmul.f32 %v2226, %v2226
    %v2243 = vmul.f32 %v2227, %v2227
    %v2244 = vmul.f32 %v2228, %v2228
    %v2245 = vmul.f32 %v2229, %v2229
    %v2246 = vmul.f32 %v2230, %v2230
    %v2247 = vmul.f32 %v2231, %v2231
    %v2248 = vmul.f32 %v2232, %v2232
    %v2249 = vmul.f32 %v2233, %v2233
    %v2250 = vmul.f32 %v2234, %v2234
    %v2251 = vmul.f32 %v2235, %v2235
    %v2252 = vmul.f32 %v2236, %v2236
    %v2253 = vmul.f32 %v2237, %v2237
    %v2254 = vsel %vm108, %v2238, 0.0
    %2255 = vadd.xlane.f32.xlu0 %v2254
    %v2256 = vpop.xlane.xlu0 %2255
    %v2257 = vsel %vm108, %v2239, 0.0
    %2258 = vadd.xlane.f32.xlu0 %v2257
    %v2259 = vpop.xlane.xlu0 %2258
    %v2260 = vsel %vm108, %v2240, 0.0
    %2261 = vadd.xlane.f32.xlu0 %v2260
    %v2262 = vpop.xlane.xlu0 %2261
    %v2263 = vsel %vm108, %v2241, 0.0
    %2264 = vadd.xlane.f32.xlu0 %v2263
    %v2265 = vpop.xlane.xlu0 %2264
    %v2266 = vsel %vm108, %v2242, 0.0
    %2267 = vadd.xlane.f32.xlu0 %v2266
    %v2268 = vpop.xlane.xlu0 %2267
    %v2269 = vsel %vm108, %v2243, 0.0
    %2270 = vadd.xlane.f32.xlu0 %v2269
    %v2271 = vpop.xlane.xlu0 %2270
    %v2272 = vsel %vm108, %v2244, 0.0
    %2273 = vadd.xlane.f32.xlu0 %v2272
    %v2274 = vpop.xlane.xlu0 %2273
    %v2275 = vsel %vm108, %v2245, 0.0
    %2276 = vadd.xlane.f32.xlu0 %v2275
    %v2277 = vpop.xlane.xlu0 %2276
    %v2278 = vsel %vm108, %v2246, 0.0
    %2279 = vadd.xlane.f32.xlu0 %v2278
    %v2280 = vpop.xlane.xlu0 %2279
    %v2281 = vsel %vm108, %v2247, 0.0
    %2282 = vadd.xlane.f32.xlu0 %v2281
    %v2283 = vpop.xlane.xlu0 %2282
    %v2284 = vsel %vm108, %v2248, 0.0
    %2285 = vadd.xlane.f32.xlu0 %v2284
    %v2286 = vpop.xlane.xlu0 %2285
    %v2287 = vsel %vm108, %v2249, 0.0
    %2288 = vadd.xlane.f32.xlu0 %v2287
    %v2289 = vpop.xlane.xlu0 %2288
    %v2290 = vsel %vm108, %v2250, 0.0
    %2291 = vadd.xlane.f32.xlu0 %v2290
    %v2292 = vpop.xlane.xlu0 %2291
    %v2293 = vsel %vm108, %v2251, 0.0
    %2294 = vadd.xlane.f32.xlu0 %v2293
    %v2295 = vpop.xlane.xlu0 %2294
    %v2296 = vsel %vm108, %v2252, 0.0
    %2297 = vadd.xlane.f32.xlu0 %v2296
    %v2298 = vpop.xlane.xlu0 %2297
    %v2299 = vsel %vm108, %v2253, 0.0
    %2300 = vadd.xlane.f32.xlu0 %v2299
    %v2301 = vpop.xlane.xlu0 %2300
    %v2302 = vmul.f32 %v2256, %v2205
    %v2303 = vmul.f32 %v2259, %v2205
    %v2304 = vmul.f32 %v2262, %v2205
    %v2305 = vmul.f32 %v2265, %v2205
    %v2306 = vmul.f32 %v2268, %v2205
    %v2307 = vmul.f32 %v2271, %v2205
    %v2308 = vmul.f32 %v2274, %v2205
    %v2309 = vmul.f32 %v2277, %v2205
    %v2310 = vmul.f32 %v2280, %v2205
    %v2311 = vmul.f32 %v2283, %v2205
    %v2312 = vmul.f32 %v2286, %v2205
    %v2313 = vmul.f32 %v2289, %v2205
    %v2314 = vmul.f32 %v2292, %v2205
    %v2315 = vmul.f32 %v2295, %v2205
    %v2316 = vmul.f32 %v2298, %v2205
    %v2317 = vmul.f32 %v2301, %v2205
    %v2318 = vadd.f32 %v2302, 1e-05
    %v2319 = vadd.f32 %v2303, 1e-05
    %v2320 = vadd.f32 %v2304, 1e-05
    %v2321 = vadd.f32 %v2305, 1e-05
    %v2322 = vadd.f32 %v2306, 1e-05
    %v2323 = vadd.f32 %v2307, 1e-05
    %v2324 = vadd.f32 %v2308, 1e-05
    %v2325 = vadd.f32 %v2309, 1e-05
    %v2326 = vadd.f32 %v2310, 1e-05
    %v2327 = vadd.f32 %v2311, 1e-05
    %v2328 = vadd.f32 %v2312, 1e-05
    %v2329 = vadd.f32 %v2313, 1e-05
    %v2330 = vadd.f32 %v2314, 1e-05
    %v2331 = vadd.f32 %v2315, 1e-05
    %v2332 = vadd.f32 %v2316, 1e-05
    %v2333 = vadd.f32 %v2317, 1e-05
    %v2334 = vrsqrt.pop %v2318
    %v2335 = vrsqrt.pop %v2319
    %v2336 = vrsqrt.pop %v2320
    %v2337 = vrsqrt.pop %v2321
    %v2338 = vrsqrt.pop %v2322
    %v2339 = vrsqrt.pop %v2323
    %v2340 = vrsqrt.pop %v2324
    %v2341 = vrsqrt.pop %v2325
    %v2342 = vrsqrt.pop %v2326
    %v2343 = vrsqrt.pop %v2327
    %v2344 = vrsqrt.pop %v2328
    %v2345 = vrsqrt.pop %v2329
    %v2346 = vrsqrt.pop %v2330
    %v2347 = vrsqrt.pop %v2331
    %v2348 = vrsqrt.pop %v2332
    %v2349 = vrsqrt.pop %v2333
    %v2350 = vmul.f32 %v2222, %v2334
    %v2351 = vmul.f32 %v2223, %v2335
    %v2352 = vmul.f32 %v2224, %v2336
    %v2353 = vmul.f32 %v2225, %v2337
    %v2354 = vmul.f32 %v2226, %v2338
    %v2355 = vmul.f32 %v2227, %v2339
    %v2356 = vmul.f32 %v2228, %v2340
    %v2357 = vmul.f32 %v2229, %v2341
    %v2358 = vmul.f32 %v2230, %v2342
    %v2359 = vmul.f32 %v2231, %v2343
    %v2360 = vmul.f32 %v2232, %v2344
    %v2361 = vmul.f32 %v2233, %v2345
    %v2362 = vmul.f32 %v2234, %v2346
    %v2363 = vmul.f32 %v2235, %v2347
    %v2364 = vmul.f32 %v2236, %v2348
    %v2365 = vmul.f32 %v2237, %v2349
    %v2366 = vld [vmem:[%s5] sm:$0x1]
    %v2368 = vlaneseq
    %v2369 = vshrl.u32 %v2368, 7
    %v2370 = vsub.s32 0, %v2369
    %v2371 = vrot.slane %v2366, %v2370
    %v2373 = vmul.f32 %v2350, %v2371
    %v2374 = vmul.f32 %v2351, %v2371
    %v2375 = vmul.f32 %v2352, %v2371
    %v2376 = vmul.f32 %v2353, %v2371
    %v2377 = vmul.f32 %v2354, %v2371
    %v2378 = vmul.f32 %v2355, %v2371
    %v2379 = vmul.f32 %v2356, %v2371
    %v2380 = vmul.f32 %v2357, %v2371
    %v2381 = vmul.f32 %v2358, %v2371
    %v2382 = vmul.f32 %v2359, %v2371
    %v2383 = vmul.f32 %v2360, %v2371
    %v2384 = vmul.f32 %v2361, %v2371
    %v2385 = vmul.f32 %v2362, %v2371
    %v2386 = vmul.f32 %v2363, %v2371
    %v2387 = vmul.f32 %v2364, %v2371
    %v2388 = vmul.f32 %v2365, %v2371
    %v2389 = vld [vmem:[%s6] sm:$0x1]
    %v2391 = vlaneseq
    %v2392 = vshrl.u32 %v2391, 7
    %v2393 = vsub.s32 0, %v2392
    %v2394 = vrot.slane %v2389, %v2393
    %v2396 = vadd.f32 %v2373, %v2394
    %v2397 = vadd.f32 %v2374, %v2394
    %v2398 = vadd.f32 %v2375, %v2394
    %v2399 = vadd.f32 %v2376, %v2394
    %v2400 = vadd.f32 %v2377, %v2394
    %v2401 = vadd.f32 %v2378, %v2394
    %v2402 = vadd.f32 %v2379, %v2394
    %v2403 = vadd.f32 %v2380, %v2394
    %v2404 = vadd.f32 %v2381, %v2394
    %v2405 = vadd.f32 %v2382, %v2394
    %v2406 = vadd.f32 %v2383, %v2394
    %v2407 = vadd.f32 %v2384, %v2394
    %v2408 = vadd.f32 %v2385, %v2394
    %v2409 = vadd.f32 %v2386, %v2394
    %v2410 = vadd.f32 %v2387, %v2394
    %v2411 = vadd.f32 %v2388, %v2394
    %v2412 = vpack.c.bf16 %v2397, %v2396
    %v2413 = vpack.c.bf16 %v2399, %v2398
    %v2414 = vpack.c.bf16 %v2401, %v2400
    %v2415 = vpack.c.bf16 %v2403, %v2402
    %v2416 = vpack.c.bf16 %v2405, %v2404
    %v2417 = vpack.c.bf16 %v2407, %v2406
    %v2418 = vpack.c.bf16 %v2409, %v2408
    %v2419 = vpack.c.bf16 %v2411, %v2410
    %v2428 = vunpack.c.l.b16 %v2412
    %v2429 = vunpack.c.h.b16 %v2412
    %v2430 = vunpack.c.l.b16 %v2413
    %v2431 = vunpack.c.h.b16 %v2413
    %v2432 = vunpack.c.l.b16 %v2414
    %v2433 = vunpack.c.h.b16 %v2414
    %v2434 = vunpack.c.l.b16 %v2415
    %v2435 = vunpack.c.h.b16 %v2415
    %v2436 = vunpack.c.l.b16 %v2416
    %v2437 = vunpack.c.h.b16 %v2416
    %v2438 = vunpack.c.l.b16 %v2417
    %v2439 = vunpack.c.h.b16 %v2417
    %v2440 = vunpack.c.l.b16 %v2418
    %v2441 = vunpack.c.h.b16 %v2418
    %v2442 = vunpack.c.l.b16 %v2419
    %v2443 = vunpack.c.h.b16 %v2419
    %v2444 = vpack.c.b16 %v2428, %v2428
    %v2445 = vpack.c.b16 %v2429, %v2429
    %v2446 = vpack.c.b16 %v2430, %v2430
    %v2447 = vpack.c.b16 %v2431, %v2431
    %v2448 = vpack.c.b16 %v2432, %v2432
    %v2449 = vpack.c.b16 %v2433, %v2433
    %v2450 = vpack.c.b16 %v2434, %v2434
    %v2451 = vpack.c.b16 %v2435, %v2435
    %v2452 = vpack.c.b16 %v2436, %v2436
    %v2453 = vpack.c.b16 %v2437, %v2437
    %v2454 = vpack.c.b16 %v2438, %v2438
    %v2455 = vpack.c.b16 %v2439, %v2439
    %v2456 = vpack.c.b16 %v2440, %v2440
    %v2457 = vpack.c.b16 %v2441, %v2441
    %v2458 = vpack.c.b16 %v2442, %v2442
    %v2459 = vpack.c.b16 %v2443, %v2443
    %vm2476 = vcmask 257024
    %2477 = vst.msk [vmem:[#allocation2] sm:$0xf] %vm2476, %v2444
    %2478 = vst.msk [vmem:[#allocation2 + $0x4] sm:$0xf] %vm2476, %v2445
    %2479 = vst.msk [vmem:[#allocation2 + $0x8] sm:$0xf] %vm2476, %v2446
    %2480 = vst.msk [vmem:[#allocation2 + $0xc] sm:$0xf] %vm2476, %v2447
    %2481 = vst.msk [vmem:[#allocation2 + $0x10] sm:$0xf] %vm2476, %v2448
    %2482 = vst.msk [vmem:[#allocation2 + $0x14] sm:$0xf] %vm2476, %v2449
    %2483 = vst.msk [vmem:[#allocation2 + $0x18] sm:$0xf] %vm2476, %v2450
    %2484 = vst.msk [vmem:[#allocation2 + $0x1c] sm:$0xf] %vm2476, %v2451
    %2485 = vst.msk [vmem:[#allocation2 + $0x20] sm:$0xf] %vm2476, %v2452
    %2486 = vst.msk [vmem:[#allocation2 + $0x24] sm:$0xf] %vm2476, %v2453
    %2487 = vst.msk [vmem:[#allocation2 + $0x28] sm:$0xf] %vm2476, %v2454
    %2488 = vst.msk [vmem:[#allocation2 + $0x2c] sm:$0xf] %vm2476, %v2455
    %2489 = vst.msk [vmem:[#allocation2 + $0x30] sm:$0xf] %vm2476, %v2456
    %2490 = vst.msk [vmem:[#allocation2 + $0x34] sm:$0xf] %vm2476, %v2457
    %2491 = vst.msk [vmem:[#allocation2 + $0x38] sm:$0xf] %vm2476, %v2458
    %2492 = vst.msk [vmem:[#allocation2 + $0x3c] sm:$0xf] %vm2476, %v2459
    // Predicated region
    $region30: #{protein_features_forward.1} parent=1 // pred_check
      _
    $region31: #{protein_features_forward.1} parent=1 // pred_check_branch
      %2494 = sbr.rel (0) target = $region33
    $region32: #{protein_features_forward.1} parent=1 // pred_region
      %s2496 = ssub.s32 1024, 1024
      %2497 = vsyncadd [#allocation3], %s2496
      %s2498 = sshll.u32 [#allocation2], 4
      %s2499 = int_to_ptr.vmem [resolvable:$true] %s2498
      %2504 = dma.vmem_to_hbm [thread:$0]  %s2499, 1024, %s7, [#allocation3], 64, 64, 4
    $region33: #{protein_features_forward.1} parent=1 // pred_fallthru
      _
    // Predicated region
    $region34: #{protein_features_forward.1} parent=1 // pred_check
      _
    $region35: #{protein_features_forward.1} parent=1 // pred_check_branch
      %2506 = sbr.rel (0) target = $region37
    $region36: #{protein_features_forward.1} parent=1 // pred_region
      %2507 = dma.done [#allocation3], 1024
    $region37: #{protein_features_forward.1} parent=1 // pred_fallthru
      _
    %2508 = vsyncpa [#allocation3], 1

</llo_original>
